<compile_context>
chip_gen: v7x
topology: tpu7x:2x2x1
jax: 0.10.0
libtpu: 0.0.40
codegen_flags: <defaults>
</compile_context>

<pallas_src>
import functools
import math

import jax
import jax.numpy as jnp
from jax import lax
from jax.experimental import pallas as pl
from jax.experimental.pallas import tpu as pltpu


# ----------------------------- Pallas kernel -----------------------------

def _layer_norm(x, g, b, eps=1e-5):
    # LayerNorm over the last dim, f32, eps matches the PyTorch default.
    mu = jnp.mean(x, axis=-1, keepdims=True)
    xc = x - mu
    var = jnp.mean(xc * xc, axis=-1, keepdims=True)
    return xc * lax.rsqrt(var + eps) * g + b


def _fused_forward_kernel(xr_ref, emb_w_ref, emb_b_ref, pe_ref, mask_ref,
                          wqkv_ref, wo_ref, w1_ref, w2_ref, vecs_ref,
                          pool_ref, fc_w_ref, fc_b_ref,
                          o_ref, attn_scr, *, num_layers, num_heads):
    # Whole forward pass fused: embed+PE -> num_layers encoder layers ->
    # mean-pool -> fc.  Everything lives in VMEM; only o_ref hits HBM.
    E = emb_w_ref.shape[1]                     # d_model
    F = w1_ref.shape[2]                        # ff_dim
    hd = E // num_heads
    scale = 1.0 / math.sqrt(hd)
    cd = emb_w_ref.dtype                       # bf16 matmul inputs, f32 acc

    # ---- LinearEmbed + positional encoding (dropout identity in eval) ----
    x = (jnp.dot(xr_ref[...].astype(cd), emb_w_ref[...],
                 preferred_element_type=jnp.float32)
         + emb_b_ref[...] + pe_ref[...])                       # (N, E) f32

    # Block-diagonal additive mask (0 within a chunk, -1e30 across chunks):
    # lets the score/PV matmuls run over the whole (N, *) slab per head.
    mask = mask_ref[...]                                       # (N, N) f32

    for l in range(num_layers):
        vec = vecs_ref[l]                      # (8, PW) f32 packed vectors
        bqkv = vec[0:1, :3 * E]
        bo = vec[1:2, :E]
        b1 = vec[2:3, :F]
        b2 = vec[3:4, :E]
        g1 = vec[4:5, :E]
        be1 = vec[5:6, :E]
        g2 = vec[6:7, :E]
        be2 = vec[7:8, :E]

        # --- self-attention: QKV projection over the whole slab ---
        qkv = jnp.dot(x.astype(cd), wqkv_ref[l],
                      preferred_element_type=jnp.float32) + bqkv   # (N, 3E)

        for h in range(num_heads):
            q = qkv[:, h * hd:(h + 1) * hd].astype(cd)
            k = qkv[:, E + h * hd:E + (h + 1) * hd].astype(cd)
            v = qkv[:, 2 * E + h * hd:2 * E + (h + 1) * hd].astype(cd)
            # (N, N) scores for all chunks at once, masked block-diagonal.
            s = lax.dot_general(q, k, (((1,), (1,)), ((), ())),
                                preferred_element_type=jnp.float32) * scale
            s = s + mask
            s = s - jnp.max(s, axis=-1, keepdims=True)
            p = jnp.exp(s)
            p = p / jnp.sum(p, axis=-1, keepdims=True)
            oh = jnp.dot(p.astype(cd), v,
                         preferred_element_type=jnp.float32)      # (N, hd)
            # heads are contiguous hd-wide column slabs of the scratch
            attn_scr[:, h * hd:(h + 1) * hd] = oh

        # single (N, E) @ (E, E) out-projection over all heads
        attn = jnp.dot(attn_scr[...].astype(cd), wo_ref[l],
                       preferred_element_type=jnp.float32) + bo

        # --- post-norm residual block 1 ---
        y = _layer_norm(x + attn, g1, be1)

        # --- feed-forward (ReLU) + post-norm residual block 2 ---
        ff = jnp.maximum(
            jnp.dot(y.astype(cd), w1_ref[l],
                    preferred_element_type=jnp.float32) + b1, 0.0)
        ff = jnp.dot(ff.astype(cd), w2_ref[l],
                     preferred_element_type=jnp.float32) + b2
        x = _layer_norm(y + ff, g2, be2)

    # ---- mean-pool over chunks (AdaptiveAvgPool1d(1)) + final fc ----
    # pool_ref[b, n] = 1/T if row n belongs to batch b else 0 (f32 matmul).
    pooled = jnp.dot(pool_ref[...], x, preferred_element_type=jnp.float32)
    o_ref[...] = (jnp.dot(pooled.astype(cd), fc_w_ref[...],
                          preferred_element_type=jnp.float32)
                  + fc_b_ref[...])


# ----------------------------- parameters -----------------------------

def make_pe(max_len, d_model):
    position = jnp.arange(max_len, dtype=jnp.float32)[:, None]
    div_term = jnp.exp(
        jnp.arange(0, d_model, 2, dtype=jnp.float32)
        * (-math.log(10000.0) / d_model))
    angles = position * div_term                               # (max_len, d/2)
    pe = jnp.stack([jnp.sin(angles), jnp.cos(angles)], axis=-1).reshape(
        max_len, d_model)
    return pe[:, None, :]      # (max_len, 1, d_model), matches register_buffer


def init_params(key, *, num_layers, d_model, ff_dim, num_lead, chunk_len,
                embedding_dim, max_len=5000):
    chunk_dim = num_lead * chunk_len
    E, F = d_model, ff_dim
    PW = max(3 * E, F)                       # packed-vector slab width
    keys = iter(jax.random.split(key, 4 + 8 * num_layers))

    def w(shape, scale=0.05):
        # matmul weights stored bf16: halves HBM/VMEM traffic, native MXU rate
        return (scale * jax.random.normal(next(keys), shape)).astype(jnp.bfloat16)

    def b(shape, scale=0.05):
        # biases / LN params / PE stay f32 (accumulation + LN stats in f32)
        return (scale * jax.random.normal(next(keys), shape)).astype(jnp.float32)

    def pad(v):
        return jnp.pad(v, (0, PW - v.shape[0]))

    embed_w = w((chunk_dim, E))
    embed_b = b((1, E))
    fc_w = w((E, embedding_dim))
    fc_b = b((1, embedding_dim))

    wqkv, wo, w1, w2, vecs = [], [], [], [], []
    for _ in range(num_layers):
        wqkv.append(w((E, 3 * E)))
        wo.append(w((E, E)))
        w1.append(w((E, F)))
        w2.append(w((F, E)))
        bqkv = b((3 * E,))
        bo = b((E,))
        b1 = b((F,))
        b2 = b((E,))
        g1 = jnp.ones((E,), jnp.float32)
        be1 = jnp.zeros((E,), jnp.float32)
        g2 = jnp.ones((E,), jnp.float32)
        be2 = jnp.zeros((E,), jnp.float32)
        # pack the 8 per-layer f32 vectors into one (8, PW) slab
        vecs.append(jnp.stack([pad(bqkv), pad(bo), pad(b1), pad(b2),
                               pad(g1), pad(be1), pad(g2), pad(be2)]))

    return {
        "embed_w": embed_w, "embed_b": embed_b,
        "pe": make_pe(max_len, d_model),
        "fc_w": fc_w, "fc_b": fc_b,
        "wqkv": jnp.stack(wqkv), "wo": jnp.stack(wo),
        "w1": jnp.stack(w1), "w2": jnp.stack(w2),
        "vecs": jnp.stack(vecs),
    }


# ----------------------------- forward pass -----------------------------

def transformer_forward(params, x, *, num_heads, chunk_len):
    B, L, seqlen = x.shape
    E = params["embed_w"].shape[1]
    F = params["w1"].shape[2]
    emb_dim = params["fc_w"].shape[1]
    num_layers = params["wqkv"].shape[0]
    T = seqlen // chunk_len
    chunk_dim = L * chunk_len
    N = T * B
    hd = E // num_heads

    # ---- LinearEmbed input re-layout: rows ordered (t, b) so chunk t of
    # batch b sits at row n = t*B + b of the (N, chunk_dim) slab. ----
    xr = jnp.transpose(x.reshape(B, L, T, chunk_len), (2, 0, 1, 3))
    xr = xr.reshape(N, chunk_dim)

    # PE indexed by batch size (faithful to the reference): row (t, b) -> pe[b]
    pe_rows = jnp.tile(params["pe"][:B, 0, :], (T, 1))             # (N, E)

    # Block-diagonal attention mask: chunks are independent attention problems
    blk = jnp.arange(N, dtype=jnp.int32) // B
    attn_mask = jnp.where(blk[:, None] == blk[None, :],
                          0.0, -1e30).astype(jnp.float32)          # (N, N)

    # Mean over chunks for each batch row (rows of batch b are strided by B)
    pool_mat = jnp.where(
        jnp.arange(N, dtype=jnp.int32)[None, :] % B ==
        jnp.arange(B, dtype=jnp.int32)[:, None],
        1.0 / T, 0.0).astype(jnp.float32)                          # (B, N)

    # ---- cost estimate (scheduling hint for XLA) ----
    def mm(m, k, n):
        return 2 * m * k * n
    flops = mm(N, chunk_dim, E)
    flops += num_layers * (mm(N, E, 3 * E)
                           + num_heads * (mm(N, hd, N) + mm(N, N, hd))
                           + mm(N, E, E) + mm(N, E, F) + mm(N, F, E))
    flops += mm(B, N, E) + mm(B, E, emb_dim)
    transcendentals = num_layers * (num_heads * N * N + 4 * N)
    operands = (xr, params["embed_w"], params["embed_b"], pe_rows, attn_mask,
                params["wqkv"], params["wo"], params["w1"], params["w2"],
                params["vecs"], pool_mat, params["fc_w"], params["fc_b"])
    bytes_accessed = (sum(int(a.size) * a.dtype.itemsize for a in operands)
                      + B * emb_dim * 4)
    cost = pl.CostEstimate(flops=flops, transcendentals=transcendentals,
                           bytes_accessed=bytes_accessed)

    kernel = functools.partial(_fused_forward_kernel,
                               num_layers=num_layers, num_heads=num_heads)
    # Single fused pallas_call, no grid: all weights + the (N, E) activation
    # stay resident in VMEM; only the (B, embedding_dim) result is written.
    return pl.pallas_call(
        kernel,
        out_shape=jax.ShapeDtypeStruct((B, emb_dim), jnp.float32),
        scratch_shapes=[pltpu.VMEM((N, E), jnp.float32)],
        cost_estimate=cost,
    )(*operands)


# ----------------------------- driver -----------------------------

if __name__ == "__main__":
    # small, module-consistent shapes
    B, num_lead, seqlen = 2, 4, 128
    chunk_len = 16
    d_model = 32
    num_heads = 4
    ff_dim = 64
    num_layers = 2
    embedding_dim = 32

    key = jax.random.PRNGKey(0)
    pkey, xkey = jax.random.split(key)

    params = init_params(
        pkey,
        num_layers=num_layers,
        d_model=d_model,
        ff_dim=ff_dim,
        num_lead=num_lead,
        chunk_len=chunk_len,
        embedding_dim=embedding_dim,
    )

    x = jax.random.normal(xkey, (B, num_lead, seqlen), dtype=jnp.float32)

    fwd = jax.jit(
        functools.partial(transformer_forward,
                          num_heads=num_heads, chunk_len=chunk_len))
    out = jax.block_until_ready(fwd(params, x))
    assert out.shape == (B, embedding_dim), out.shape
    assert out.dtype == jnp.float32
    print("KERNEL_OK")
</pallas_src>

<mosaic_0001>
module attributes {stable_mosaic.version = 11 : i64} {
  func.func @_fused_forward_kernel(%arg0: memref<16x64xf32, #tpu.memory_space<vmem>>, %arg1: memref<64x32xbf16, #tpu.memory_space<vmem>>, %arg2: memref<1x32xf32, #tpu.memory_space<vmem>>, %arg3: memref<16x32xf32, #tpu.memory_space<vmem>>, %arg4: memref<16x16xf32, #tpu.memory_space<vmem>>, %arg5: memref<2x32x96xbf16, #tpu.memory_space<vmem>>, %arg6: memref<2x32x32xbf16, #tpu.memory_space<vmem>>, %arg7: memref<2x32x64xbf16, #tpu.memory_space<vmem>>, %arg8: memref<2x64x32xbf16, #tpu.memory_space<vmem>>, %arg9: memref<2x8x96xf32, #tpu.memory_space<vmem>>, %arg10: memref<2x16xf32, #tpu.memory_space<vmem>>, %arg11: memref<32x32xbf16, #tpu.memory_space<vmem>>, %arg12: memref<1x32xf32, #tpu.memory_space<vmem>>, %arg13: memref<2x32xf32, #tpu.memory_space<vmem>>, %arg14: memref<16x32xf32, #tpu.memory_space<vmem>>) attributes {dimension_semantics = [], scalar_prefetch = 0 : i64, scratch_operands = 1 : i64, tpu.core_type = #tpu.core_type<tc>} {
    %c0 = arith.constant 0 : index
    %c0_0 = arith.constant 0 : index
    %0 = vector.load %arg0[%c0, %c0_0] : memref<16x64xf32, #tpu.memory_space<vmem>>, vector<16x64xf32>
    %1 = arith.truncf %0 : vector<16x64xf32> to vector<16x64xbf16>
    %c0_1 = arith.constant 0 : index
    %c0_2 = arith.constant 0 : index
    %2 = vector.load %arg1[%c0_1, %c0_2] : memref<64x32xbf16, #tpu.memory_space<vmem>>, vector<64x32xbf16>
    %cst = arith.constant dense<0.000000e+00> : vector<16x32xf32>
    %3 = tpu.matmul %1, %2, %cst {dimension_numbers = #tpu.dot_dimension_numbers<[1], [0], [0], [1], [0, 0, 1, 1], [], []>} : vector<16x64xbf16>, vector<64x32xbf16>, vector<16x32xf32> -> vector<16x32xf32>
    %c0_3 = arith.constant 0 : index
    %c0_4 = arith.constant 0 : index
    %4 = vector.load %arg2[%c0_3, %c0_4] : memref<1x32xf32, #tpu.memory_space<vmem>>, vector<1x32xf32>
    %5 = vector.broadcast %4 : vector<1x32xf32> to vector<16x32xf32>
    %6 = arith.addf %3, %5 : vector<16x32xf32>
    %c0_5 = arith.constant 0 : index
    %c0_6 = arith.constant 0 : index
    %7 = vector.load %arg3[%c0_5, %c0_6] : memref<16x32xf32, #tpu.memory_space<vmem>>, vector<16x32xf32>
    %8 = arith.addf %6, %7 : vector<16x32xf32>
    %c0_7 = arith.constant 0 : index
    %c0_8 = arith.constant 0 : index
    %9 = vector.load %arg4[%c0_7, %c0_8] : memref<16x16xf32, #tpu.memory_space<vmem>>, vector<16x16xf32>
    %c0_9 = arith.constant 0 : index
    %c0_10 = arith.constant 0 : index
    %c0_11 = arith.constant 0 : index
    %10 = vector.load %arg9[%c0_9, %c0_10, %c0_11] : memref<2x8x96xf32, #tpu.memory_space<vmem>>, vector<1x8x96xf32>
    %11 = vector.shape_cast %10 : vector<1x8x96xf32> to vector<8x96xf32>
    %12 = vector.extract_strided_slice %11 {offsets = [0, 0], sizes = [1, 96], strides = [1, 1]} : vector<8x96xf32> to vector<1x96xf32>
    %13 = vector.extract_strided_slice %11 {offsets = [1, 0], sizes = [1, 32], strides = [1, 1]} : vector<8x96xf32> to vector<1x32xf32>
    %14 = vector.extract_strided_slice %11 {offsets = [2, 0], sizes = [1, 64], strides = [1, 1]} : vector<8x96xf32> to vector<1x64xf32>
    %15 = vector.extract_strided_slice %11 {offsets = [3, 0], sizes = [1, 32], strides = [1, 1]} : vector<8x96xf32> to vector<1x32xf32>
    %16 = vector.extract_strided_slice %11 {offsets = [4, 0], sizes = [1, 32], strides = [1, 1]} : vector<8x96xf32> to vector<1x32xf32>
    %17 = vector.extract_strided_slice %11 {offsets = [5, 0], sizes = [1, 32], strides = [1, 1]} : vector<8x96xf32> to vector<1x32xf32>
    %18 = vector.extract_strided_slice %11 {offsets = [6, 0], sizes = [1, 32], strides = [1, 1]} : vector<8x96xf32> to vector<1x32xf32>
    %19 = vector.extract_strided_slice %11 {offsets = [7, 0], sizes = [1, 32], strides = [1, 1]} : vector<8x96xf32> to vector<1x32xf32>
    %20 = arith.truncf %8 : vector<16x32xf32> to vector<16x32xbf16>
    %c0_12 = arith.constant 0 : index
    %c0_13 = arith.constant 0 : index
    %c0_14 = arith.constant 0 : index
    %21 = vector.load %arg5[%c0_12, %c0_13, %c0_14] : memref<2x32x96xbf16, #tpu.memory_space<vmem>>, vector<1x32x96xbf16>
    %22 = vector.shape_cast %21 : vector<1x32x96xbf16> to vector<32x96xbf16>
    %cst_15 = arith.constant dense<0.000000e+00> : vector<16x96xf32>
    %23 = tpu.matmul %20, %22, %cst_15 {dimension_numbers = #tpu.dot_dimension_numbers<[1], [0], [0], [1], [0, 0, 1, 1], [], []>} : vector<16x32xbf16>, vector<32x96xbf16>, vector<16x96xf32> -> vector<16x96xf32>
    %24 = vector.broadcast %12 : vector<1x96xf32> to vector<16x96xf32>
    %25 = arith.addf %23, %24 : vector<16x96xf32>
    %26 = vector.extract_strided_slice %25 {offsets = [0, 0], sizes = [16, 8], strides = [1, 1]} : vector<16x96xf32> to vector<16x8xf32>
    %27 = arith.truncf %26 : vector<16x8xf32> to vector<16x8xbf16>
    %28 = vector.extract_strided_slice %25 {offsets = [0, 32], sizes = [16, 8], strides = [1, 1]} : vector<16x96xf32> to vector<16x8xf32>
    %29 = arith.truncf %28 : vector<16x8xf32> to vector<16x8xbf16>
    %30 = vector.extract_strided_slice %25 {offsets = [0, 64], sizes = [16, 8], strides = [1, 1]} : vector<16x96xf32> to vector<16x8xf32>
    %31 = arith.truncf %30 : vector<16x8xf32> to vector<16x8xbf16>
    %cst_16 = arith.constant dense<0.000000e+00> : vector<16x16xf32>
    %32 = tpu.matmul %27, %29, %cst_16 {dimension_numbers = #tpu.dot_dimension_numbers<[1], [1], [0], [0], [0, 0, 1, 0], [], []>} : vector<16x8xbf16>, vector<16x8xbf16>, vector<16x16xf32> -> vector<16x16xf32>
    %cst_17 = arith.constant 0.353553385 : f32
    %33 = vector.broadcast %cst_17 : f32 to vector<16x16xf32>
    %34 = arith.mulf %32, %33 : vector<16x16xf32>
    %35 = arith.addf %34, %9 : vector<16x16xf32>
    %cst_18 = arith.constant dense<0xFF800000> : vector<16xf32>
    %36 = vector.multi_reduction <maximumf>, %35, %cst_18 [1] : vector<16x16xf32> to vector<16xf32>
    %37 = vector.shape_cast %36 : vector<16xf32> to vector<16x1xf32>
    %38 = vector.broadcast %37 : vector<16x1xf32> to vector<16x16xf32>
    %39 = arith.subf %35, %38 : vector<16x16xf32>
    %40 = math.exp %39 : vector<16x16xf32>
    %cst_19 = arith.constant dense<0.000000e+00> : vector<16xf32>
    %41 = vector.multi_reduction <add>, %40, %cst_19 [1] : vector<16x16xf32> to vector<16xf32>
    %42 = vector.shape_cast %41 : vector<16xf32> to vector<16x1xf32>
    %43 = vector.broadcast %42 : vector<16x1xf32> to vector<16x16xf32>
    %44 = arith.divf %40, %43 : vector<16x16xf32>
    %45 = arith.truncf %44 : vector<16x16xf32> to vector<16x16xbf16>
    %cst_20 = arith.constant dense<0.000000e+00> : vector<16x8xf32>
    %46 = tpu.matmul %45, %31, %cst_20 {dimension_numbers = #tpu.dot_dimension_numbers<[1], [0], [0], [1], [0, 0, 1, 1], [], []>} : vector<16x16xbf16>, vector<16x8xbf16>, vector<16x8xf32> -> vector<16x8xf32>
    %c0_21 = arith.constant 0 : index
    %c0_22 = arith.constant 0 : index
    %47 = vector.load %arg14[%c0_21, %c0_22] : memref<16x32xf32, #tpu.memory_space<vmem>>, vector<16x8xf32>
    tpu.vector_store %arg14[%c0_21, %c0_22], %46 {strides = array<i32>} : memref<16x32xf32, #tpu.memory_space<vmem>>, vector<16x8xf32>,
    %48 = vector.extract_strided_slice %25 {offsets = [0, 8], sizes = [16, 8], strides = [1, 1]} : vector<16x96xf32> to vector<16x8xf32>
    %49 = arith.truncf %48 : vector<16x8xf32> to vector<16x8xbf16>
    %50 = vector.extract_strided_slice %25 {offsets = [0, 40], sizes = [16, 8], strides = [1, 1]} : vector<16x96xf32> to vector<16x8xf32>
    %51 = arith.truncf %50 : vector<16x8xf32> to vector<16x8xbf16>
    %52 = vector.extract_strided_slice %25 {offsets = [0, 72], sizes = [16, 8], strides = [1, 1]} : vector<16x96xf32> to vector<16x8xf32>
    %53 = arith.truncf %52 : vector<16x8xf32> to vector<16x8xbf16>
    %cst_23 = arith.constant dense<0.000000e+00> : vector<16x16xf32>
    %54 = tpu.matmul %49, %51, %cst_23 {dimension_numbers = #tpu.dot_dimension_numbers<[1], [1], [0], [0], [0, 0, 1, 0], [], []>} : vector<16x8xbf16>, vector<16x8xbf16>, vector<16x16xf32> -> vector<16x16xf32>
    %cst_24 = arith.constant 0.353553385 : f32
    %55 = vector.broadcast %cst_24 : f32 to vector<16x16xf32>
    %56 = arith.mulf %54, %55 : vector<16x16xf32>
    %57 = arith.addf %56, %9 : vector<16x16xf32>
    %cst_25 = arith.constant dense<0xFF800000> : vector<16xf32>
    %58 = vector.multi_reduction <maximumf>, %57, %cst_25 [1] : vector<16x16xf32> to vector<16xf32>
    %59 = vector.shape_cast %58 : vector<16xf32> to vector<16x1xf32>
    %60 = vector.broadcast %59 : vector<16x1xf32> to vector<16x16xf32>
    %61 = arith.subf %57, %60 : vector<16x16xf32>
    %62 = math.exp %61 : vector<16x16xf32>
    %cst_26 = arith.constant dense<0.000000e+00> : vector<16xf32>
    %63 = vector.multi_reduction <add>, %62, %cst_26 [1] : vector<16x16xf32> to vector<16xf32>
    %64 = vector.shape_cast %63 : vector<16xf32> to vector<16x1xf32>
    %65 = vector.broadcast %64 : vector<16x1xf32> to vector<16x16xf32>
    %66 = arith.divf %62, %65 : vector<16x16xf32>
    %67 = arith.truncf %66 : vector<16x16xf32> to vector<16x16xbf16>
    %cst_27 = arith.constant dense<0.000000e+00> : vector<16x8xf32>
    %68 = tpu.matmul %67, %53, %cst_27 {dimension_numbers = #tpu.dot_dimension_numbers<[1], [0], [0], [1], [0, 0, 1, 1], [], []>} : vector<16x16xbf16>, vector<16x8xbf16>, vector<16x8xf32> -> vector<16x8xf32>
    %c0_28 = arith.constant 0 : index
    %c8 = arith.constant 8 : index
    %69 = vector.load %arg14[%c0_28, %c8] : memref<16x32xf32, #tpu.memory_space<vmem>>, vector<16x8xf32>
    tpu.vector_store %arg14[%c0_28, %c8], %68 {strides = array<i32>} : memref<16x32xf32, #tpu.memory_space<vmem>>, vector<16x8xf32>,
    %70 = vector.extract_strided_slice %25 {offsets = [0, 16], sizes = [16, 8], strides = [1, 1]} : vector<16x96xf32> to vector<16x8xf32>
    %71 = arith.truncf %70 : vector<16x8xf32> to vector<16x8xbf16>
    %72 = vector.extract_strided_slice %25 {offsets = [0, 48], sizes = [16, 8], strides = [1, 1]} : vector<16x96xf32> to vector<16x8xf32>
    %73 = arith.truncf %72 : vector<16x8xf32> to vector<16x8xbf16>
    %74 = vector.extract_strided_slice %25 {offsets = [0, 80], sizes = [16, 8], strides = [1, 1]} : vector<16x96xf32> to vector<16x8xf32>
    %75 = arith.truncf %74 : vector<16x8xf32> to vector<16x8xbf16>
    %cst_29 = arith.constant dense<0.000000e+00> : vector<16x16xf32>
    %76 = tpu.matmul %71, %73, %cst_29 {dimension_numbers = #tpu.dot_dimension_numbers<[1], [1], [0], [0], [0, 0, 1, 0], [], []>} : vector<16x8xbf16>, vector<16x8xbf16>, vector<16x16xf32> -> vector<16x16xf32>
    %cst_30 = arith.constant 0.353553385 : f32
    %77 = vector.broadcast %cst_30 : f32 to vector<16x16xf32>
    %78 = arith.mulf %76, %77 : vector<16x16xf32>
    %79 = arith.addf %78, %9 : vector<16x16xf32>
    %cst_31 = arith.constant dense<0xFF800000> : vector<16xf32>
    %80 = vector.multi_reduction <maximumf>, %79, %cst_31 [1] : vector<16x16xf32> to vector<16xf32>
    %81 = vector.shape_cast %80 : vector<16xf32> to vector<16x1xf32>
    %82 = vector.broadcast %81 : vector<16x1xf32> to vector<16x16xf32>
    %83 = arith.subf %79, %82 : vector<16x16xf32>
    %84 = math.exp %83 : vector<16x16xf32>
    %cst_32 = arith.constant dense<0.000000e+00> : vector<16xf32>
    %85 = vector.multi_reduction <add>, %84, %cst_32 [1] : vector<16x16xf32> to vector<16xf32>
    %86 = vector.shape_cast %85 : vector<16xf32> to vector<16x1xf32>
    %87 = vector.broadcast %86 : vector<16x1xf32> to vector<16x16xf32>
    %88 = arith.divf %84, %87 : vector<16x16xf32>
    %89 = arith.truncf %88 : vector<16x16xf32> to vector<16x16xbf16>
    %cst_33 = arith.constant dense<0.000000e+00> : vector<16x8xf32>
    %90 = tpu.matmul %89, %75, %cst_33 {dimension_numbers = #tpu.dot_dimension_numbers<[1], [0], [0], [1], [0, 0, 1, 1], [], []>} : vector<16x16xbf16>, vector<16x8xbf16>, vector<16x8xf32> -> vector<16x8xf32>
    %c0_34 = arith.constant 0 : index
    %c16 = arith.constant 16 : index
    %91 = vector.load %arg14[%c0_34, %c16] : memref<16x32xf32, #tpu.memory_space<vmem>>, vector<16x8xf32>
    tpu.vector_store %arg14[%c0_34, %c16], %90 {strides = array<i32>} : memref<16x32xf32, #tpu.memory_space<vmem>>, vector<16x8xf32>,
    %92 = vector.extract_strided_slice %25 {offsets = [0, 24], sizes = [16, 8], strides = [1, 1]} : vector<16x96xf32> to vector<16x8xf32>
    %93 = arith.truncf %92 : vector<16x8xf32> to vector<16x8xbf16>
    %94 = vector.extract_strided_slice %25 {offsets = [0, 56], sizes = [16, 8], strides = [1, 1]} : vector<16x96xf32> to vector<16x8xf32>
    %95 = arith.truncf %94 : vector<16x8xf32> to vector<16x8xbf16>
    %96 = vector.extract_strided_slice %25 {offsets = [0, 88], sizes = [16, 8], strides = [1, 1]} : vector<16x96xf32> to vector<16x8xf32>
    %97 = arith.truncf %96 : vector<16x8xf32> to vector<16x8xbf16>
    %cst_35 = arith.constant dense<0.000000e+00> : vector<16x16xf32>
    %98 = tpu.matmul %93, %95, %cst_35 {dimension_numbers = #tpu.dot_dimension_numbers<[1], [1], [0], [0], [0, 0, 1, 0], [], []>} : vector<16x8xbf16>, vector<16x8xbf16>, vector<16x16xf32> -> vector<16x16xf32>
    %cst_36 = arith.constant 0.353553385 : f32
    %99 = vector.broadcast %cst_36 : f32 to vector<16x16xf32>
    %100 = arith.mulf %98, %99 : vector<16x16xf32>
    %101 = arith.addf %100, %9 : vector<16x16xf32>
    %cst_37 = arith.constant dense<0xFF800000> : vector<16xf32>
    %102 = vector.multi_reduction <maximumf>, %101, %cst_37 [1] : vector<16x16xf32> to vector<16xf32>
    %103 = vector.shape_cast %102 : vector<16xf32> to vector<16x1xf32>
    %104 = vector.broadcast %103 : vector<16x1xf32> to vector<16x16xf32>
    %105 = arith.subf %101, %104 : vector<16x16xf32>
    %106 = math.exp %105 : vector<16x16xf32>
    %cst_38 = arith.constant dense<0.000000e+00> : vector<16xf32>
    %107 = vector.multi_reduction <add>, %106, %cst_38 [1] : vector<16x16xf32> to vector<16xf32>
    %108 = vector.shape_cast %107 : vector<16xf32> to vector<16x1xf32>
    %109 = vector.broadcast %108 : vector<16x1xf32> to vector<16x16xf32>
    %110 = arith.divf %106, %109 : vector<16x16xf32>
    %111 = arith.truncf %110 : vector<16x16xf32> to vector<16x16xbf16>
    %cst_39 = arith.constant dense<0.000000e+00> : vector<16x8xf32>
    %112 = tpu.matmul %111, %97, %cst_39 {dimension_numbers = #tpu.dot_dimension_numbers<[1], [0], [0], [1], [0, 0, 1, 1], [], []>} : vector<16x16xbf16>, vector<16x8xbf16>, vector<16x8xf32> -> vector<16x8xf32>
    %c0_40 = arith.constant 0 : index
    %c24 = arith.constant 24 : index
    %113 = vector.load %arg14[%c0_40, %c24] : memref<16x32xf32, #tpu.memory_space<vmem>>, vector<16x8xf32>
    tpu.vector_store %arg14[%c0_40, %c24], %112 {strides = array<i32>} : memref<16x32xf32, #tpu.memory_space<vmem>>, vector<16x8xf32>,
    %c0_41 = arith.constant 0 : index
    %c0_42 = arith.constant 0 : index
    %114 = vector.load %arg14[%c0_41, %c0_42] : memref<16x32xf32, #tpu.memory_space<vmem>>, vector<16x32xf32>
    %115 = arith.truncf %114 : vector<16x32xf32> to vector<16x32xbf16>
    %c0_43 = arith.constant 0 : index
    %c0_44 = arith.constant 0 : index
    %c0_45 = arith.constant 0 : index
    %116 = vector.load %arg6[%c0_43, %c0_44, %c0_45] : memref<2x32x32xbf16, #tpu.memory_space<vmem>>, vector<1x32x32xbf16>
    %117 = vector.shape_cast %116 : vector<1x32x32xbf16> to vector<32x32xbf16>
    %cst_46 = arith.constant dense<0.000000e+00> : vector<16x32xf32>
    %118 = tpu.matmul %115, %117, %cst_46 {dimension_numbers = #tpu.dot_dimension_numbers<[1], [0], [0], [1], [0, 0, 1, 1], [], []>} : vector<16x32xbf16>, vector<32x32xbf16>, vector<16x32xf32> -> vector<16x32xf32>
    %119 = vector.broadcast %13 : vector<1x32xf32> to vector<16x32xf32>
    %120 = arith.addf %118, %119 : vector<16x32xf32>
    %121 = arith.addf %8, %120 : vector<16x32xf32>
    %cst_47 = arith.constant dense<0.000000e+00> : vector<16xf32>
    %122 = vector.multi_reduction <add>, %121, %cst_47 [1] : vector<16x32xf32> to vector<16xf32>
    %123 = vector.shape_cast %122 : vector<16xf32> to vector<16x1xf32>
    %cst_48 = arith.constant 3.200000e+01 : f32
    %124 = vector.broadcast %cst_48 : f32 to vector<16x1xf32>
    %125 = arith.divf %123, %124 : vector<16x1xf32>
    %126 = vector.broadcast %125 : vector<16x1xf32> to vector<16x32xf32>
    %127 = arith.subf %121, %126 : vector<16x32xf32>
    %128 = arith.mulf %127, %127 : vector<16x32xf32>
    %cst_49 = arith.constant dense<0.000000e+00> : vector<16xf32>
    %129 = vector.multi_reduction <add>, %128, %cst_49 [1] : vector<16x32xf32> to vector<16xf32>
    %130 = vector.shape_cast %129 : vector<16xf32> to vector<16x1xf32>
    %cst_50 = arith.constant 3.200000e+01 : f32
    %131 = vector.broadcast %cst_50 : f32 to vector<16x1xf32>
    %132 = arith.divf %130, %131 : vector<16x1xf32>
    %cst_51 = arith.constant 9.99999974E-6 : f32
    %133 = vector.broadcast %cst_51 : f32 to vector<16x1xf32>
    %134 = arith.addf %132, %133 : vector<16x1xf32>
    %135 = math.rsqrt %134 : vector<16x1xf32>
    %136 = vector.broadcast %135 : vector<16x1xf32> to vector<16x32xf32>
    %137 = arith.mulf %127, %136 : vector<16x32xf32>
    %138 = vector.broadcast %16 : vector<1x32xf32> to vector<16x32xf32>
    %139 = arith.mulf %137, %138 : vector<16x32xf32>
    %140 = vector.broadcast %17 : vector<1x32xf32> to vector<16x32xf32>
    %141 = arith.addf %139, %140 : vector<16x32xf32>
    %142 = arith.truncf %141 : vector<16x32xf32> to vector<16x32xbf16>
    %c0_52 = arith.constant 0 : index
    %c0_53 = arith.constant 0 : index
    %c0_54 = arith.constant 0 : index
    %143 = vector.load %arg7[%c0_52, %c0_53, %c0_54] : memref<2x32x64xbf16, #tpu.memory_space<vmem>>, vector<1x32x64xbf16>
    %144 = vector.shape_cast %143 : vector<1x32x64xbf16> to vector<32x64xbf16>
    %cst_55 = arith.constant dense<0.000000e+00> : vector<16x64xf32>
    %145 = tpu.matmul %142, %144, %cst_55 {dimension_numbers = #tpu.dot_dimension_numbers<[1], [0], [0], [1], [0, 0, 1, 1], [], []>} : vector<16x32xbf16>, vector<32x64xbf16>, vector<16x64xf32> -> vector<16x64xf32>
    %146 = vector.broadcast %14 : vector<1x64xf32> to vector<16x64xf32>
    %147 = arith.addf %145, %146 : vector<16x64xf32>
    %cst_56 = arith.constant 0.000000e+00 : f32
    %148 = vector.broadcast %cst_56 : f32 to vector<16x64xf32>
    %149 = arith.maximumf %147, %148 : vector<16x64xf32>
    %150 = arith.truncf %149 : vector<16x64xf32> to vector<16x64xbf16>
    %c0_57 = arith.constant 0 : index
    %c0_58 = arith.constant 0 : index
    %c0_59 = arith.constant 0 : index
    %151 = vector.load %arg8[%c0_57, %c0_58, %c0_59] : memref<2x64x32xbf16, #tpu.memory_space<vmem>>, vector<1x64x32xbf16>
    %152 = vector.shape_cast %151 : vector<1x64x32xbf16> to vector<64x32xbf16>
    %cst_60 = arith.constant dense<0.000000e+00> : vector<16x32xf32>
    %153 = tpu.matmul %150, %152, %cst_60 {dimension_numbers = #tpu.dot_dimension_numbers<[1], [0], [0], [1], [0, 0, 1, 1], [], []>} : vector<16x64xbf16>, vector<64x32xbf16>, vector<16x32xf32> -> vector<16x32xf32>
    %154 = vector.broadcast %15 : vector<1x32xf32> to vector<16x32xf32>
    %155 = arith.addf %153, %154 : vector<16x32xf32>
    %156 = arith.addf %141, %155 : vector<16x32xf32>
    %cst_61 = arith.constant dense<0.000000e+00> : vector<16xf32>
    %157 = vector.multi_reduction <add>, %156, %cst_61 [1] : vector<16x32xf32> to vector<16xf32>
    %158 = vector.shape_cast %157 : vector<16xf32> to vector<16x1xf32>
    %cst_62 = arith.constant 3.200000e+01 : f32
    %159 = vector.broadcast %cst_62 : f32 to vector<16x1xf32>
    %160 = arith.divf %158, %159 : vector<16x1xf32>
    %161 = vector.broadcast %160 : vector<16x1xf32> to vector<16x32xf32>
    %162 = arith.subf %156, %161 : vector<16x32xf32>
    %163 = arith.mulf %162, %162 : vector<16x32xf32>
    %cst_63 = arith.constant dense<0.000000e+00> : vector<16xf32>
    %164 = vector.multi_reduction <add>, %163, %cst_63 [1] : vector<16x32xf32> to vector<16xf32>
    %165 = vector.shape_cast %164 : vector<16xf32> to vector<16x1xf32>
    %cst_64 = arith.constant 3.200000e+01 : f32
    %166 = vector.broadcast %cst_64 : f32 to vector<16x1xf32>
    %167 = arith.divf %165, %166 : vector<16x1xf32>
    %cst_65 = arith.constant 9.99999974E-6 : f32
    %168 = vector.broadcast %cst_65 : f32 to vector<16x1xf32>
    %169 = arith.addf %167, %168 : vector<16x1xf32>
    %170 = math.rsqrt %169 : vector<16x1xf32>
    %171 = vector.broadcast %170 : vector<16x1xf32> to vector<16x32xf32>
    %172 = arith.mulf %162, %171 : vector<16x32xf32>
    %173 = vector.broadcast %18 : vector<1x32xf32> to vector<16x32xf32>
    %174 = arith.mulf %172, %173 : vector<16x32xf32>
    %175 = vector.broadcast %19 : vector<1x32xf32> to vector<16x32xf32>
    %176 = arith.addf %174, %175 : vector<16x32xf32>
    %c1 = arith.constant 1 : index
    %c0_66 = arith.constant 0 : index
    %c0_67 = arith.constant 0 : index
    %177 = vector.load %arg9[%c1, %c0_66, %c0_67] : memref<2x8x96xf32, #tpu.memory_space<vmem>>, vector<1x8x96xf32>
    %178 = vector.shape_cast %177 : vector<1x8x96xf32> to vector<8x96xf32>
    %179 = vector.extract_strided_slice %178 {offsets = [0, 0], sizes = [1, 96], strides = [1, 1]} : vector<8x96xf32> to vector<1x96xf32>
    %180 = vector.extract_strided_slice %178 {offsets = [1, 0], sizes = [1, 32], strides = [1, 1]} : vector<8x96xf32> to vector<1x32xf32>
    %181 = vector.extract_strided_slice %178 {offsets = [2, 0], sizes = [1, 64], strides = [1, 1]} : vector<8x96xf32> to vector<1x64xf32>
    %182 = vector.extract_strided_slice %178 {offsets = [3, 0], sizes = [1, 32], strides = [1, 1]} : vector<8x96xf32> to vector<1x32xf32>
    %183 = vector.extract_strided_slice %178 {offsets = [4, 0], sizes = [1, 32], strides = [1, 1]} : vector<8x96xf32> to vector<1x32xf32>
    %184 = vector.extract_strided_slice %178 {offsets = [5, 0], sizes = [1, 32], strides = [1, 1]} : vector<8x96xf32> to vector<1x32xf32>
    %185 = vector.extract_strided_slice %178 {offsets = [6, 0], sizes = [1, 32], strides = [1, 1]} : vector<8x96xf32> to vector<1x32xf32>
    %186 = vector.extract_strided_slice %178 {offsets = [7, 0], sizes = [1, 32], strides = [1, 1]} : vector<8x96xf32> to vector<1x32xf32>
    %187 = arith.truncf %176 : vector<16x32xf32> to vector<16x32xbf16>
    %c1_68 = arith.constant 1 : index
    %c0_69 = arith.constant 0 : index
    %c0_70 = arith.constant 0 : index
    %188 = vector.load %arg5[%c1_68, %c0_69, %c0_70] : memref<2x32x96xbf16, #tpu.memory_space<vmem>>, vector<1x32x96xbf16>
    %189 = vector.shape_cast %188 : vector<1x32x96xbf16> to vector<32x96xbf16>
    %cst_71 = arith.constant dense<0.000000e+00> : vector<16x96xf32>
    %190 = tpu.matmul %187, %189, %cst_71 {dimension_numbers = #tpu.dot_dimension_numbers<[1], [0], [0], [1], [0, 0, 1, 1], [], []>} : vector<16x32xbf16>, vector<32x96xbf16>, vector<16x96xf32> -> vector<16x96xf32>
    %191 = vector.broadcast %179 : vector<1x96xf32> to vector<16x96xf32>
    %192 = arith.addf %190, %191 : vector<16x96xf32>
    %193 = vector.extract_strided_slice %192 {offsets = [0, 0], sizes = [16, 8], strides = [1, 1]} : vector<16x96xf32> to vector<16x8xf32>
    %194 = arith.truncf %193 : vector<16x8xf32> to vector<16x8xbf16>
    %195 = vector.extract_strided_slice %192 {offsets = [0, 32], sizes = [16, 8], strides = [1, 1]} : vector<16x96xf32> to vector<16x8xf32>
    %196 = arith.truncf %195 : vector<16x8xf32> to vector<16x8xbf16>
    %197 = vector.extract_strided_slice %192 {offsets = [0, 64], sizes = [16, 8], strides = [1, 1]} : vector<16x96xf32> to vector<16x8xf32>
    %198 = arith.truncf %197 : vector<16x8xf32> to vector<16x8xbf16>
    %cst_72 = arith.constant dense<0.000000e+00> : vector<16x16xf32>
    %199 = tpu.matmul %194, %196, %cst_72 {dimension_numbers = #tpu.dot_dimension_numbers<[1], [1], [0], [0], [0, 0, 1, 0], [], []>} : vector<16x8xbf16>, vector<16x8xbf16>, vector<16x16xf32> -> vector<16x16xf32>
    %cst_73 = arith.constant 0.353553385 : f32
    %200 = vector.broadcast %cst_73 : f32 to vector<16x16xf32>
    %201 = arith.mulf %199, %200 : vector<16x16xf32>
    %202 = arith.addf %201, %9 : vector<16x16xf32>
    %cst_74 = arith.constant dense<0xFF800000> : vector<16xf32>
    %203 = vector.multi_reduction <maximumf>, %202, %cst_74 [1] : vector<16x16xf32> to vector<16xf32>
    %204 = vector.shape_cast %203 : vector<16xf32> to vector<16x1xf32>
    %205 = vector.broadcast %204 : vector<16x1xf32> to vector<16x16xf32>
    %206 = arith.subf %202, %205 : vector<16x16xf32>
    %207 = math.exp %206 : vector<16x16xf32>
    %cst_75 = arith.constant dense<0.000000e+00> : vector<16xf32>
    %208 = vector.multi_reduction <add>, %207, %cst_75 [1] : vector<16x16xf32> to vector<16xf32>
    %209 = vector.shape_cast %208 : vector<16xf32> to vector<16x1xf32>
    %210 = vector.broadcast %209 : vector<16x1xf32> to vector<16x16xf32>
    %211 = arith.divf %207, %210 : vector<16x16xf32>
    %212 = arith.truncf %211 : vector<16x16xf32> to vector<16x16xbf16>
    %cst_76 = arith.constant dense<0.000000e+00> : vector<16x8xf32>
    %213 = tpu.matmul %212, %198, %cst_76 {dimension_numbers = #tpu.dot_dimension_numbers<[1], [0], [0], [1], [0, 0, 1, 1], [], []>} : vector<16x16xbf16>, vector<16x8xbf16>, vector<16x8xf32> -> vector<16x8xf32>
    %c0_77 = arith.constant 0 : index
    %c0_78 = arith.constant 0 : index
    %214 = vector.load %arg14[%c0_77, %c0_78] : memref<16x32xf32, #tpu.memory_space<vmem>>, vector<16x8xf32>
    tpu.vector_store %arg14[%c0_77, %c0_78], %213 {strides = array<i32>} : memref<16x32xf32, #tpu.memory_space<vmem>>, vector<16x8xf32>,
    %215 = vector.extract_strided_slice %192 {offsets = [0, 8], sizes = [16, 8], strides = [1, 1]} : vector<16x96xf32> to vector<16x8xf32>
    %216 = arith.truncf %215 : vector<16x8xf32> to vector<16x8xbf16>
    %217 = vector.extract_strided_slice %192 {offsets = [0, 40], sizes = [16, 8], strides = [1, 1]} : vector<16x96xf32> to vector<16x8xf32>
    %218 = arith.truncf %217 : vector<16x8xf32> to vector<16x8xbf16>
    %219 = vector.extract_strided_slice %192 {offsets = [0, 72], sizes = [16, 8], strides = [1, 1]} : vector<16x96xf32> to vector<16x8xf32>
    %220 = arith.truncf %219 : vector<16x8xf32> to vector<16x8xbf16>
    %cst_79 = arith.constant dense<0.000000e+00> : vector<16x16xf32>
    %221 = tpu.matmul %216, %218, %cst_79 {dimension_numbers = #tpu.dot_dimension_numbers<[1], [1], [0], [0], [0, 0, 1, 0], [], []>} : vector<16x8xbf16>, vector<16x8xbf16>, vector<16x16xf32> -> vector<16x16xf32>
    %cst_80 = arith.constant 0.353553385 : f32
    %222 = vector.broadcast %cst_80 : f32 to vector<16x16xf32>
    %223 = arith.mulf %221, %222 : vector<16x16xf32>
    %224 = arith.addf %223, %9 : vector<16x16xf32>
    %cst_81 = arith.constant dense<0xFF800000> : vector<16xf32>
    %225 = vector.multi_reduction <maximumf>, %224, %cst_81 [1] : vector<16x16xf32> to vector<16xf32>
    %226 = vector.shape_cast %225 : vector<16xf32> to vector<16x1xf32>
    %227 = vector.broadcast %226 : vector<16x1xf32> to vector<16x16xf32>
    %228 = arith.subf %224, %227 : vector<16x16xf32>
    %229 = math.exp %228 : vector<16x16xf32>
    %cst_82 = arith.constant dense<0.000000e+00> : vector<16xf32>
    %230 = vector.multi_reduction <add>, %229, %cst_82 [1] : vector<16x16xf32> to vector<16xf32>
    %231 = vector.shape_cast %230 : vector<16xf32> to vector<16x1xf32>
    %232 = vector.broadcast %231 : vector<16x1xf32> to vector<16x16xf32>
    %233 = arith.divf %229, %232 : vector<16x16xf32>
    %234 = arith.truncf %233 : vector<16x16xf32> to vector<16x16xbf16>
    %cst_83 = arith.constant dense<0.000000e+00> : vector<16x8xf32>
    %235 = tpu.matmul %234, %220, %cst_83 {dimension_numbers = #tpu.dot_dimension_numbers<[1], [0], [0], [1], [0, 0, 1, 1], [], []>} : vector<16x16xbf16>, vector<16x8xbf16>, vector<16x8xf32> -> vector<16x8xf32>
    %c0_84 = arith.constant 0 : index
    %c8_85 = arith.constant 8 : index
    %236 = vector.load %arg14[%c0_84, %c8_85] : memref<16x32xf32, #tpu.memory_space<vmem>>, vector<16x8xf32>
    tpu.vector_store %arg14[%c0_84, %c8_85], %235 {strides = array<i32>} : memref<16x32xf32, #tpu.memory_space<vmem>>, vector<16x8xf32>,
    %237 = vector.extract_strided_slice %192 {offsets = [0, 16], sizes = [16, 8], strides = [1, 1]} : vector<16x96xf32> to vector<16x8xf32>
    %238 = arith.truncf %237 : vector<16x8xf32> to vector<16x8xbf16>
    %239 = vector.extract_strided_slice %192 {offsets = [0, 48], sizes = [16, 8], strides = [1, 1]} : vector<16x96xf32> to vector<16x8xf32>
    %240 = arith.truncf %239 : vector<16x8xf32> to vector<16x8xbf16>
    %241 = vector.extract_strided_slice %192 {offsets = [0, 80], sizes = [16, 8], strides = [1, 1]} : vector<16x96xf32> to vector<16x8xf32>
    %242 = arith.truncf %241 : vector<16x8xf32> to vector<16x8xbf16>
    %cst_86 = arith.constant dense<0.000000e+00> : vector<16x16xf32>
    %243 = tpu.matmul %238, %240, %cst_86 {dimension_numbers = #tpu.dot_dimension_numbers<[1], [1], [0], [0], [0, 0, 1, 0], [], []>} : vector<16x8xbf16>, vector<16x8xbf16>, vector<16x16xf32> -> vector<16x16xf32>
    %cst_87 = arith.constant 0.353553385 : f32
    %244 = vector.broadcast %cst_87 : f32 to vector<16x16xf32>
    %245 = arith.mulf %243, %244 : vector<16x16xf32>
    %246 = arith.addf %245, %9 : vector<16x16xf32>
    %cst_88 = arith.constant dense<0xFF800000> : vector<16xf32>
    %247 = vector.multi_reduction <maximumf>, %246, %cst_88 [1] : vector<16x16xf32> to vector<16xf32>
    %248 = vector.shape_cast %247 : vector<16xf32> to vector<16x1xf32>
    %249 = vector.broadcast %248 : vector<16x1xf32> to vector<16x16xf32>
    %250 = arith.subf %246, %249 : vector<16x16xf32>
    %251 = math.exp %250 : vector<16x16xf32>
    %cst_89 = arith.constant dense<0.000000e+00> : vector<16xf32>
    %252 = vector.multi_reduction <add>, %251, %cst_89 [1] : vector<16x16xf32> to vector<16xf32>
    %253 = vector.shape_cast %252 : vector<16xf32> to vector<16x1xf32>
    %254 = vector.broadcast %253 : vector<16x1xf32> to vector<16x16xf32>
    %255 = arith.divf %251, %254 : vector<16x16xf32>
    %256 = arith.truncf %255 : vector<16x16xf32> to vector<16x16xbf16>
    %cst_90 = arith.constant dense<0.000000e+00> : vector<16x8xf32>
    %257 = tpu.matmul %256, %242, %cst_90 {dimension_numbers = #tpu.dot_dimension_numbers<[1], [0], [0], [1], [0, 0, 1, 1], [], []>} : vector<16x16xbf16>, vector<16x8xbf16>, vector<16x8xf32> -> vector<16x8xf32>
    %c0_91 = arith.constant 0 : index
    %c16_92 = arith.constant 16 : index
    %258 = vector.load %arg14[%c0_91, %c16_92] : memref<16x32xf32, #tpu.memory_space<vmem>>, vector<16x8xf32>
    tpu.vector_store %arg14[%c0_91, %c16_92], %257 {strides = array<i32>} : memref<16x32xf32, #tpu.memory_space<vmem>>, vector<16x8xf32>,
    %259 = vector.extract_strided_slice %192 {offsets = [0, 24], sizes = [16, 8], strides = [1, 1]} : vector<16x96xf32> to vector<16x8xf32>
    %260 = arith.truncf %259 : vector<16x8xf32> to vector<16x8xbf16>
    %261 = vector.extract_strided_slice %192 {offsets = [0, 56], sizes = [16, 8], strides = [1, 1]} : vector<16x96xf32> to vector<16x8xf32>
    %262 = arith.truncf %261 : vector<16x8xf32> to vector<16x8xbf16>
    %263 = vector.extract_strided_slice %192 {offsets = [0, 88], sizes = [16, 8], strides = [1, 1]} : vector<16x96xf32> to vector<16x8xf32>
    %264 = arith.truncf %263 : vector<16x8xf32> to vector<16x8xbf16>
    %cst_93 = arith.constant dense<0.000000e+00> : vector<16x16xf32>
    %265 = tpu.matmul %260, %262, %cst_93 {dimension_numbers = #tpu.dot_dimension_numbers<[1], [1], [0], [0], [0, 0, 1, 0], [], []>} : vector<16x8xbf16>, vector<16x8xbf16>, vector<16x16xf32> -> vector<16x16xf32>
    %cst_94 = arith.constant 0.353553385 : f32
    %266 = vector.broadcast %cst_94 : f32 to vector<16x16xf32>
    %267 = arith.mulf %265, %266 : vector<16x16xf32>
    %268 = arith.addf %267, %9 : vector<16x16xf32>
    %cst_95 = arith.constant dense<0xFF800000> : vector<16xf32>
    %269 = vector.multi_reduction <maximumf>, %268, %cst_95 [1] : vector<16x16xf32> to vector<16xf32>
    %270 = vector.shape_cast %269 : vector<16xf32> to vector<16x1xf32>
    %271 = vector.broadcast %270 : vector<16x1xf32> to vector<16x16xf32>
    %272 = arith.subf %268, %271 : vector<16x16xf32>
    %273 = math.exp %272 : vector<16x16xf32>
    %cst_96 = arith.constant dense<0.000000e+00> : vector<16xf32>
    %274 = vector.multi_reduction <add>, %273, %cst_96 [1] : vector<16x16xf32> to vector<16xf32>
    %275 = vector.shape_cast %274 : vector<16xf32> to vector<16x1xf32>
    %276 = vector.broadcast %275 : vector<16x1xf32> to vector<16x16xf32>
    %277 = arith.divf %273, %276 : vector<16x16xf32>
    %278 = arith.truncf %277 : vector<16x16xf32> to vector<16x16xbf16>
    %cst_97 = arith.constant dense<0.000000e+00> : vector<16x8xf32>
    %279 = tpu.matmul %278, %264, %cst_97 {dimension_numbers = #tpu.dot_dimension_numbers<[1], [0], [0], [1], [0, 0, 1, 1], [], []>} : vector<16x16xbf16>, vector<16x8xbf16>, vector<16x8xf32> -> vector<16x8xf32>
    %c0_98 = arith.constant 0 : index
    %c24_99 = arith.constant 24 : index
    %280 = vector.load %arg14[%c0_98, %c24_99] : memref<16x32xf32, #tpu.memory_space<vmem>>, vector<16x8xf32>
    tpu.vector_store %arg14[%c0_98, %c24_99], %279 {strides = array<i32>} : memref<16x32xf32, #tpu.memory_space<vmem>>, vector<16x8xf32>,
    %c0_100 = arith.constant 0 : index
    %c0_101 = arith.constant 0 : index
    %281 = vector.load %arg14[%c0_100, %c0_101] : memref<16x32xf32, #tpu.memory_space<vmem>>, vector<16x32xf32>
    %282 = arith.truncf %281 : vector<16x32xf32> to vector<16x32xbf16>
    %c1_102 = arith.constant 1 : index
    %c0_103 = arith.constant 0 : index
    %c0_104 = arith.constant 0 : index
    %283 = vector.load %arg6[%c1_102, %c0_103, %c0_104] : memref<2x32x32xbf16, #tpu.memory_space<vmem>>, vector<1x32x32xbf16>
    %284 = vector.shape_cast %283 : vector<1x32x32xbf16> to vector<32x32xbf16>
    %cst_105 = arith.constant dense<0.000000e+00> : vector<16x32xf32>
    %285 = tpu.matmul %282, %284, %cst_105 {dimension_numbers = #tpu.dot_dimension_numbers<[1], [0], [0], [1], [0, 0, 1, 1], [], []>} : vector<16x32xbf16>, vector<32x32xbf16>, vector<16x32xf32> -> vector<16x32xf32>
    %286 = vector.broadcast %180 : vector<1x32xf32> to vector<16x32xf32>
    %287 = arith.addf %285, %286 : vector<16x32xf32>
    %288 = arith.addf %176, %287 : vector<16x32xf32>
    %cst_106 = arith.constant dense<0.000000e+00> : vector<16xf32>
    %289 = vector.multi_reduction <add>, %288, %cst_106 [1] : vector<16x32xf32> to vector<16xf32>
    %290 = vector.shape_cast %289 : vector<16xf32> to vector<16x1xf32>
    %cst_107 = arith.constant 3.200000e+01 : f32
    %291 = vector.broadcast %cst_107 : f32 to vector<16x1xf32>
    %292 = arith.divf %290, %291 : vector<16x1xf32>
    %293 = vector.broadcast %292 : vector<16x1xf32> to vector<16x32xf32>
    %294 = arith.subf %288, %293 : vector<16x32xf32>
    %295 = arith.mulf %294, %294 : vector<16x32xf32>
    %cst_108 = arith.constant dense<0.000000e+00> : vector<16xf32>
    %296 = vector.multi_reduction <add>, %295, %cst_108 [1] : vector<16x32xf32> to vector<16xf32>
    %297 = vector.shape_cast %296 : vector<16xf32> to vector<16x1xf32>
    %cst_109 = arith.constant 3.200000e+01 : f32
    %298 = vector.broadcast %cst_109 : f32 to vector<16x1xf32>
    %299 = arith.divf %297, %298 : vector<16x1xf32>
    %cst_110 = arith.constant 9.99999974E-6 : f32
    %300 = vector.broadcast %cst_110 : f32 to vector<16x1xf32>
    %301 = arith.addf %299, %300 : vector<16x1xf32>
    %302 = math.rsqrt %301 : vector<16x1xf32>
    %303 = vector.broadcast %302 : vector<16x1xf32> to vector<16x32xf32>
    %304 = arith.mulf %294, %303 : vector<16x32xf32>
    %305 = vector.broadcast %183 : vector<1x32xf32> to vector<16x32xf32>
    %306 = arith.mulf %304, %305 : vector<16x32xf32>
    %307 = vector.broadcast %184 : vector<1x32xf32> to vector<16x32xf32>
    %308 = arith.addf %306, %307 : vector<16x32xf32>
    %309 = arith.truncf %308 : vector<16x32xf32> to vector<16x32xbf16>
    %c1_111 = arith.constant 1 : index
    %c0_112 = arith.constant 0 : index
    %c0_113 = arith.constant 0 : index
    %310 = vector.load %arg7[%c1_111, %c0_112, %c0_113] : memref<2x32x64xbf16, #tpu.memory_space<vmem>>, vector<1x32x64xbf16>
    %311 = vector.shape_cast %310 : vector<1x32x64xbf16> to vector<32x64xbf16>
    %cst_114 = arith.constant dense<0.000000e+00> : vector<16x64xf32>
    %312 = tpu.matmul %309, %311, %cst_114 {dimension_numbers = #tpu.dot_dimension_numbers<[1], [0], [0], [1], [0, 0, 1, 1], [], []>} : vector<16x32xbf16>, vector<32x64xbf16>, vector<16x64xf32> -> vector<16x64xf32>
    %313 = vector.broadcast %181 : vector<1x64xf32> to vector<16x64xf32>
    %314 = arith.addf %312, %313 : vector<16x64xf32>
    %cst_115 = arith.constant 0.000000e+00 : f32
    %315 = vector.broadcast %cst_115 : f32 to vector<16x64xf32>
    %316 = arith.maximumf %314, %315 : vector<16x64xf32>
    %317 = arith.truncf %316 : vector<16x64xf32> to vector<16x64xbf16>
    %c1_116 = arith.constant 1 : index
    %c0_117 = arith.constant 0 : index
    %c0_118 = arith.constant 0 : index
    %318 = vector.load %arg8[%c1_116, %c0_117, %c0_118] : memref<2x64x32xbf16, #tpu.memory_space<vmem>>, vector<1x64x32xbf16>
    %319 = vector.shape_cast %318 : vector<1x64x32xbf16> to vector<64x32xbf16>
    %cst_119 = arith.constant dense<0.000000e+00> : vector<16x32xf32>
    %320 = tpu.matmul %317, %319, %cst_119 {dimension_numbers = #tpu.dot_dimension_numbers<[1], [0], [0], [1], [0, 0, 1, 1], [], []>} : vector<16x64xbf16>, vector<64x32xbf16>, vector<16x32xf32> -> vector<16x32xf32>
    %321 = vector.broadcast %182 : vector<1x32xf32> to vector<16x32xf32>
    %322 = arith.addf %320, %321 : vector<16x32xf32>
    %323 = arith.addf %308, %322 : vector<16x32xf32>
    %cst_120 = arith.constant dense<0.000000e+00> : vector<16xf32>
    %324 = vector.multi_reduction <add>, %323, %cst_120 [1] : vector<16x32xf32> to vector<16xf32>
    %325 = vector.shape_cast %324 : vector<16xf32> to vector<16x1xf32>
    %cst_121 = arith.constant 3.200000e+01 : f32
    %326 = vector.broadcast %cst_121 : f32 to vector<16x1xf32>
    %327 = arith.divf %325, %326 : vector<16x1xf32>
    %328 = vector.broadcast %327 : vector<16x1xf32> to vector<16x32xf32>
    %329 = arith.subf %323, %328 : vector<16x32xf32>
    %330 = arith.mulf %329, %329 : vector<16x32xf32>
    %cst_122 = arith.constant dense<0.000000e+00> : vector<16xf32>
    %331 = vector.multi_reduction <add>, %330, %cst_122 [1] : vector<16x32xf32> to vector<16xf32>
    %332 = vector.shape_cast %331 : vector<16xf32> to vector<16x1xf32>
    %cst_123 = arith.constant 3.200000e+01 : f32
    %333 = vector.broadcast %cst_123 : f32 to vector<16x1xf32>
    %334 = arith.divf %332, %333 : vector<16x1xf32>
    %cst_124 = arith.constant 9.99999974E-6 : f32
    %335 = vector.broadcast %cst_124 : f32 to vector<16x1xf32>
    %336 = arith.addf %334, %335 : vector<16x1xf32>
    %337 = math.rsqrt %336 : vector<16x1xf32>
    %338 = vector.broadcast %337 : vector<16x1xf32> to vector<16x32xf32>
    %339 = arith.mulf %329, %338 : vector<16x32xf32>
    %340 = vector.broadcast %185 : vector<1x32xf32> to vector<16x32xf32>
    %341 = arith.mulf %339, %340 : vector<16x32xf32>
    %342 = vector.broadcast %186 : vector<1x32xf32> to vector<16x32xf32>
    %343 = arith.addf %341, %342 : vector<16x32xf32>
    %c0_125 = arith.constant 0 : index
    %c0_126 = arith.constant 0 : index
    %344 = vector.load %arg10[%c0_125, %c0_126] : memref<2x16xf32, #tpu.memory_space<vmem>>, vector<2x16xf32>
    %cst_127 = arith.constant dense<0.000000e+00> : vector<2x32xf32>
    %345 = tpu.matmul %344, %343, %cst_127 {dimension_numbers = #tpu.dot_dimension_numbers<[1], [0], [0], [1], [0, 0, 1, 1], [], []>} : vector<2x16xf32>, vector<16x32xf32>, vector<2x32xf32> -> vector<2x32xf32>
    %346 = arith.truncf %345 : vector<2x32xf32> to vector<2x32xbf16>
    %c0_128 = arith.constant 0 : index
    %c0_129 = arith.constant 0 : index
    %347 = vector.load %arg11[%c0_128, %c0_129] : memref<32x32xbf16, #tpu.memory_space<vmem>>, vector<32x32xbf16>
    %cst_130 = arith.constant dense<0.000000e+00> : vector<2x32xf32>
    %348 = tpu.matmul %346, %347, %cst_130 {dimension_numbers = #tpu.dot_dimension_numbers<[1], [0], [0], [1], [0, 0, 1, 1], [], []>} : vector<2x32xbf16>, vector<32x32xbf16>, vector<2x32xf32> -> vector<2x32xf32>
    %c0_131 = arith.constant 0 : index
    %c0_132 = arith.constant 0 : index
    %349 = vector.load %arg12[%c0_131, %c0_132] : memref<1x32xf32, #tpu.memory_space<vmem>>, vector<1x32xf32>
    %350 = vector.broadcast %349 : vector<1x32xf32> to vector<2x32xf32>
    %351 = arith.addf %348, %350 : vector<2x32xf32>
    %c0_133 = arith.constant 0 : index
    %c0_134 = arith.constant 0 : index
    %352 = vector.load %arg13[%c0_133, %c0_134] : memref<2x32xf32, #tpu.memory_space<vmem>>, vector<2x32xf32>
    tpu.vector_store %arg13[%c0_133, %c0_134], %351 {strides = array<i32>} : memref<2x32xf32, #tpu.memory_space<vmem>>, vector<2x32xf32>,
    return
  }
}

</mosaic_0001>

<llo_original>
// kernel: transformer_forward.1
$region0: #{transformer_forward.1}
  #allocation0 [shape = 'u32[]', space=smem, size = 0x4, offset = 0x4, fixed_abs, tag = 'smem constant byte address 0x4 - core index']
  #allocation1 [shape = 'u32[144,128]{1,0:T(1,128)}', space=vmem, size = 0x12000, scoped, tag = 'internal scratch']
  #allocation2 [shape = 'f32[16,32]{1,0:T(8,128)}', space=vmem, size = 0x2000, scoped, tag = 'scratch operand']
  %s0 = inlined_call_operand.vmem [shape: f32[16,64], index: 0, kind: input, shape index: {}]
  %s1 = inlined_call_operand.vmem [shape: bf16[64,32], index: 1, kind: input, shape index: {}]
  %s2 = inlined_call_operand.vmem [shape: f32[1,32], index: 2, kind: input, shape index: {}]
  %s3 = inlined_call_operand.vmem [shape: f32[16,32], index: 3, kind: input, shape index: {}]
  %s4 = inlined_call_operand.vmem [shape: f32[16,16], index: 4, kind: input, shape index: {}]
  %s5 = inlined_call_operand.vmem [shape: bf16[2,32,96], index: 5, kind: input, shape index: {}]
  %s6 = inlined_call_operand.vmem [shape: bf16[2,32,32], index: 6, kind: input, shape index: {}]
  %s7 = inlined_call_operand.vmem [shape: bf16[2,32,64], index: 7, kind: input, shape index: {}]
  %s8 = inlined_call_operand.vmem [shape: bf16[2,64,32], index: 8, kind: input, shape index: {}]
  %s9 = inlined_call_operand.vmem [shape: f32[2,8,96], index: 9, kind: input, shape index: {}]
  %s10 = inlined_call_operand.vmem [shape: f32[2,16], index: 10, kind: input, shape index: {}]
  %s11 = inlined_call_operand.vmem [shape: bf16[32,32], index: 11, kind: input, shape index: {}]
  %s12 = inlined_call_operand.vmem [shape: f32[1,32], index: 12, kind: input, shape index: {}]
  %s13 = inlined_call_operand.hbm [shape: f32[2,32], index: 13, kind: output, shape index: {}]
  %s14 = sld [smem:[#allocation0]]
  $region62: #{transformer_forward.1} parent=0
    _
  %s16 = ssub.s32 1, %s14
  %s17 = scalar_select 0, %s16, %s14
  $region1: #{transformer_forward.1} parent=0
    #allocation3 [shape = 'u8[1024]{0}', space=vmem, size = 0x400, scoped, tag = 'output window, operand 0, single buffered']
    #allocation4 [shape = 's32[1]{0}', space=sflag, size = 0x4, scoped, tag = 'scoped memory for transformer_forward.1']
    %18 = vsyncpa [#allocation4], 0
    // Predicated region
    $region2: #{transformer_forward.1} parent=1 // pred_check
      _
    $region3: #{transformer_forward.1} parent=1 // pred_check_branch
      %20 = sbr.rel (0) target = $region5
    $region4: #{transformer_forward.1} parent=1 // pred_region
      _
    $region5: #{transformer_forward.1} parent=1 // pred_fallthru
      _
    // Predicated region
    $region6: #{transformer_forward.1} parent=1 // pred_check
      _
    $region7: #{transformer_forward.1} parent=1 // pred_check_branch
      %22 = sbr.rel (0) target = $region9
    $region8: #{transformer_forward.1} parent=1 // pred_region
      _
    $region9: #{transformer_forward.1} parent=1 // pred_fallthru
      _
    // Predicated region
    $region10: #{transformer_forward.1} parent=1 // pred_check
      _
    $region11: #{transformer_forward.1} parent=1 // pred_check_branch
      %24 = sbr.rel (0) target = $region13
    $region12: #{transformer_forward.1} parent=1 // pred_region
      _
    $region13: #{transformer_forward.1} parent=1 // pred_fallthru
      _
    // Predicated region
    $region14: #{transformer_forward.1} parent=1 // pred_check
      _
    $region15: #{transformer_forward.1} parent=1 // pred_check_branch
      %26 = sbr.rel (0) target = $region17
    $region16: #{transformer_forward.1} parent=1 // pred_region
      _
    $region17: #{transformer_forward.1} parent=1 // pred_fallthru
      _
    // Predicated region
    $region18: #{transformer_forward.1} parent=1 // pred_check
      _
    $region19: #{transformer_forward.1} parent=1 // pred_check_branch
      %28 = sbr.rel (0) target = $region21
    $region20: #{transformer_forward.1} parent=1 // pred_region
      _
    $region21: #{transformer_forward.1} parent=1 // pred_fallthru
      _
    // Predicated region
    $region22: #{transformer_forward.1} parent=1 // pred_check
      _
    $region23: #{transformer_forward.1} parent=1 // pred_check_branch
      %30 = sbr.rel (0) target = $region25
    $region24: #{transformer_forward.1} parent=1 // pred_region
      _
    $region25: #{transformer_forward.1} parent=1 // pred_fallthru
      _
    // Predicated region
    $region26: #{transformer_forward.1} parent=1 // pred_check
      _
    $region27: #{transformer_forward.1} parent=1 // pred_check_branch
      %32 = sbr.rel (0) target = $region29
    $region28: #{transformer_forward.1} parent=1 // pred_region
      _
    $region29: #{transformer_forward.1} parent=1 // pred_fallthru
      _
    // Predicated region
    $region30: #{transformer_forward.1} parent=1 // pred_check
      _
    $region31: #{transformer_forward.1} parent=1 // pred_check_branch
      %34 = sbr.rel (0) target = $region33
    $region32: #{transformer_forward.1} parent=1 // pred_region
      _
    $region33: #{transformer_forward.1} parent=1 // pred_fallthru
      _
    // Predicated region
    $region34: #{transformer_forward.1} parent=1 // pred_check
      _
    $region35: #{transformer_forward.1} parent=1 // pred_check_branch
      %36 = sbr.rel (0) target = $region37
    $region36: #{transformer_forward.1} parent=1 // pred_region
      _
    $region37: #{transformer_forward.1} parent=1 // pred_fallthru
      _
    // Predicated region
    $region38: #{transformer_forward.1} parent=1 // pred_check
      _
    $region39: #{transformer_forward.1} parent=1 // pred_check_branch
      %38 = sbr.rel (0) target = $region41
    $region40: #{transformer_forward.1} parent=1 // pred_region
      _
    $region41: #{transformer_forward.1} parent=1 // pred_fallthru
      _
    // Predicated region
    $region42: #{transformer_forward.1} parent=1 // pred_check
      _
    $region43: #{transformer_forward.1} parent=1 // pred_check_branch
      %40 = sbr.rel (0) target = $region45
    $region44: #{transformer_forward.1} parent=1 // pred_region
      _
    $region45: #{transformer_forward.1} parent=1 // pred_fallthru
      _
    // Predicated region
    $region46: #{transformer_forward.1} parent=1 // pred_check
      _
    $region47: #{transformer_forward.1} parent=1 // pred_check_branch
      %42 = sbr.rel (0) target = $region49
    $region48: #{transformer_forward.1} parent=1 // pred_region
      _
    $region49: #{transformer_forward.1} parent=1 // pred_fallthru
      _
    // Predicated region
    $region50: #{transformer_forward.1} parent=1 // pred_check
      _
    $region51: #{transformer_forward.1} parent=1 // pred_check_branch
      %44 = sbr.rel (0) target = $region53
    $region52: #{transformer_forward.1} parent=1 // pred_region
      _
    $region53: #{transformer_forward.1} parent=1 // pred_fallthru
      _
    %v46 = vld [vmem:[%s0] sm:$0xff]
    %v47 = vld [vmem:[%s0 + $0x8] sm:$0xff]
    %v48 = vpack.c.bf16 %v47, %v46
    %v49 = vld [vmem:[%s1] sm:$0xf]
    %v50 = vld [vmem:[%s1 + $0x4] sm:$0xf]
    %v51 = vld [vmem:[%s1 + $0x8] sm:$0xf]
    %v52 = vld [vmem:[%s1 + $0xc] sm:$0xf]
    %v53 = vld [vmem:[%s1 + $0x10] sm:$0xf]
    %v54 = vld [vmem:[%s1 + $0x14] sm:$0xf]
    %v55 = vld [vmem:[%s1 + $0x18] sm:$0xf]
    %v56 = vld [vmem:[%s1 + $0x1c] sm:$0xf]
    %v57 = vld [vmem:[%s2] sm:$0x1]
    %v59 = vlaneseq
    %v60 = vshrl.u32 %v59, 7
    %v61 = vsub.s32 0, %v60
    %v62 = vrot.slane %v57, %v61
    %v72 = vunpack.c.l.b16 %v49
    %v73 = vunpack.c.l.b16 %v50
    %v74 = vunpack.c.l.b16 %v51
    %v75 = vunpack.c.l.b16 %v52
    %v76 = vunpack.c.l.b16 %v53
    %v77 = vunpack.c.l.b16 %v54
    %v78 = vunpack.c.l.b16 %v55
    %v79 = vunpack.c.l.b16 %v56
    %v80 = vpack.c.b16 %v73, %v72
    %v81 = vpack.c.b16 %v75, %v74
    %v82 = vpack.c.b16 %v77, %v76
    %v83 = vpack.c.b16 %v79, %v78
    %vm88 = vcmask 523264
    %v90 = vsel %vm88, %v48, 0
    %92 = vmatprep.subr.bf16.mxu0 0
    %93 = vmatpush1.bf16.msra.mxu0 %v80
    %94 = vmatprep.subr.bf16.mxu0 0
    %95 = vmatpush1.bf16.msra.mxu0 %v81
    %96 = vmatprep.subr.bf16.mxu0 0
    %97 = vmatpush1.bf16.msra.mxu0 %v82
    %98 = vmatprep.subr.bf16.mxu0 0
    %99 = vmatpush1.bf16.msra.mxu0 %v83
    %100 = vmatprep.subr.bf16.mxu0 0
    %101 = vmatpush1.bf16.msra.mxu0 0
    %102 = vmatprep.subr.bf16.mxu0 0
    %103 = vmatpush1.bf16.msra.mxu0 0
    %104 = vmatprep.subr.bf16.mxu0 0
    %105 = vmatpush1.bf16.msra.mxu0 0
    %106 = vmatprep.subr.bf16.mxu0 0
    %107 = vmatpush1.bf16.msra.mxu0 0
    %108 = vmatprep.subr.bf16.mxu0 0
    %109 = vmatpush1.bf16.msra.mxu0 0
    %110 = vmatprep.subr.bf16.mxu0 0
    %111 = vmatpush1.bf16.msra.mxu0 0
    %112 = vmatprep.subr.bf16.mxu0 0
    %113 = vmatpush1.bf16.msra.mxu0 0
    %114 = vmatprep.subr.bf16.mxu0 0
    %115 = vmatpush1.bf16.msra.mxu0 0
    %116 = vmatprep.subr.bf16.mxu0 0
    %117 = vmatpush1.bf16.msra.mxu0 0
    %118 = vmatprep.subr.bf16.mxu0 0
    %119 = vmatpush1.bf16.msra.mxu0 0
    %120 = vmatprep.subr.bf16.mxu0 0
    %121 = vmatpush1.bf16.msra.mxu0 0
    %122 = vmatprep.subr.bf16.mxu0 0
    %123 = vmatpush1.bf16.msra.mxu0 0
    %124 = vmatprep.mubr.bf16.mxu0 0
    %125 = vmatmul.mubr.bf16.gmra.mrb[0].mxu0 %v90
    %v126 = vpop.f32.mrb[0].mxu0
    %v127 = vadd.f32 %v62, %v126
    %v128 = vpop.f32.mrb[0].mxu0
    %v129 = vpop.f32.mrb[0].mxu0
    %v130 = vadd.f32 %v62, %v129
    %v131 = vpop.f32.mrb[0].mxu0
    %132 = vdwg.mxu0
    %v133 = vld [vmem:[%s3] sm:$0xff]
    %v134 = vld [vmem:[%s3 + $0x8] sm:$0xff]
    %v135 = vadd.f32 %v127, %v133
    %v136 = vadd.f32 %v130, %v134
    %v137 = vld [vmem:[%s4] sm:$0xff]
    %v138 = vld [vmem:[%s4 + $0x8] sm:$0xff]
    %v139 = vld [vmem:[%s9] sm:$0xff]
    %v140 = vpack.c.bf16 %v136, %v135
    %v141 = vld [vmem:[%s5] sm:$0xf]
    %v142 = vld [vmem:[%s5 + $0x4] sm:$0xf]
    %v143 = vld [vmem:[%s5 + $0x8] sm:$0xf]
    %v144 = vld [vmem:[%s5 + $0xc] sm:$0xf]
    %v145 = vlaneseq
    %v146 = vshrl.u32 %v145, 7
    %v147 = vsub.s32 0, %v146
    %v148 = vrot.slane %v139, %v147
    %v153 = vunpack.c.l.b16 %v141
    %v154 = vunpack.c.l.b16 %v142
    %v155 = vunpack.c.l.b16 %v143
    %v156 = vunpack.c.l.b16 %v144
    %v157 = vpack.c.b16 %v154, %v153
    %v158 = vpack.c.b16 %v156, %v155
    %vm161 = vcmask 261120
    %v163 = vsel %vm161, %v140, 0
    %165 = vmatprep.subr.bf16.mxu0 0
    %166 = vmatpush1.bf16.msra.mxu0 %v157
    %167 = vmatprep.subr.bf16.mxu0 0
    %168 = vmatpush1.bf16.msra.mxu0 %v158
    %169 = vmatprep.subr.bf16.mxu0 0
    %170 = vmatpush1.bf16.msra.mxu0 0
    %171 = vmatprep.subr.bf16.mxu0 0
    %172 = vmatpush1.bf16.msra.mxu0 0
    %173 = vmatprep.subr.bf16.mxu0 0
    %174 = vmatpush1.bf16.msra.mxu0 0
    %175 = vmatprep.subr.bf16.mxu0 0
    %176 = vmatpush1.bf16.msra.mxu0 0
    %177 = vmatprep.subr.bf16.mxu0 0
    %178 = vmatpush1.bf16.msra.mxu0 0
    %179 = vmatprep.subr.bf16.mxu0 0
    %180 = vmatpush1.bf16.msra.mxu0 0
    %181 = vmatprep.subr.bf16.mxu0 0
    %182 = vmatpush1.bf16.msra.mxu0 0
    %183 = vmatprep.subr.bf16.mxu0 0
    %184 = vmatpush1.bf16.msra.mxu0 0
    %185 = vmatprep.subr.bf16.mxu0 0
    %186 = vmatpush1.bf16.msra.mxu0 0
    %187 = vmatprep.subr.bf16.mxu0 0
    %188 = vmatpush1.bf16.msra.mxu0 0
    %189 = vmatprep.subr.bf16.mxu0 0
    %190 = vmatpush1.bf16.msra.mxu0 0
    %191 = vmatprep.subr.bf16.mxu0 0
    %192 = vmatpush1.bf16.msra.mxu0 0
    %193 = vmatprep.subr.bf16.mxu0 0
    %194 = vmatpush1.bf16.msra.mxu0 0
    %195 = vmatprep.subr.bf16.mxu0 0
    %196 = vmatpush1.bf16.msra.mxu0 0
    %197 = vmatprep.mubr.bf16.mxu0 0
    %198 = vmatmul.mubr.bf16.gmra.mrb[0].mxu0 %v163
    %v199 = vpop.f32.mrb[0].mxu0
    %v200 = vadd.f32 %v148, %v199
    %v201 = vpop.f32.mrb[0].mxu0
    %v202 = vpop.f32.mrb[0].mxu0
    %v203 = vadd.f32 %v148, %v202
    %v204 = vpop.f32.mrb[0].mxu0
    %205 = vdwg.mxu0
    %v206 = vpack.c.bf16 %v203, %v200
    %208 = vrot.lane.b32.xlu0 %v206, 96
    %v209 = vpop.permute.xlu0 %208
    %vm210 = vcmask 64512
    %v212 = vsel %vm210, %v206, 0
    %v215 = vsel %vm210, %v209, 0
    %217 = vmatprep.subr.bf16.mxu0 0
    %218 = vmatpush1.bf16.xpose.msra.mxu0 %v215
    %219 = vmatprep.subr.bf16.mxu0 0
    %220 = vmatpush1.bf16.xpose.msra.mxu0 0
    %221 = vmatprep.subr.bf16.mxu0 0
    %222 = vmatpush1.bf16.xpose.msra.mxu0 0
    %223 = vmatprep.subr.bf16.mxu0 0
    %224 = vmatpush1.bf16.xpose.msra.mxu0 0
    %225 = vmatprep.subr.bf16.mxu0 0
    %226 = vmatpush1.bf16.xpose.msra.mxu0 0
    %227 = vmatprep.subr.bf16.mxu0 0
    %228 = vmatpush1.bf16.xpose.msra.mxu0 0
    %229 = vmatprep.subr.bf16.mxu0 0
    %230 = vmatpush1.bf16.xpose.msra.mxu0 0
    %231 = vmatprep.subr.bf16.mxu0 0
    %232 = vmatpush1.bf16.xpose.msra.mxu0 0
    %233 = vmatprep.subr.bf16.mxu0 0
    %234 = vmatpush1.bf16.xpose.msra.mxu0 0
    %235 = vmatprep.subr.bf16.mxu0 0
    %236 = vmatpush1.bf16.xpose.msra.mxu0 0
    %237 = vmatprep.subr.bf16.mxu0 0
    %238 = vmatpush1.bf16.xpose.msra.mxu0 0
    %239 = vmatprep.subr.bf16.mxu0 0
    %240 = vmatpush1.bf16.xpose.msra.mxu0 0
    %241 = vmatprep.subr.bf16.mxu0 0
    %242 = vmatpush1.bf16.xpose.msra.mxu0 0
    %243 = vmatprep.subr.bf16.mxu0 0
    %244 = vmatpush1.bf16.xpose.msra.mxu0 0
    %245 = vmatprep.subr.bf16.mxu0 0
    %246 = vmatpush1.bf16.xpose.msra.mxu0 0
    %247 = vmatprep.subr.bf16.mxu0 0
    %248 = vmatpush1.bf16.xpose.msra.mxu0 0
    %249 = vmatprep.mubr.bf16.mxu0 0
    %250 = vmatmul.mubr.bf16.gmra.mrb[0].mxu0 %v212
    %v251 = vpop.f32.mrb[0].mxu0
    %v252 = vadd.f32 0.0, %v251
    %v253 = vpop.f32.mrb[0].mxu0
    %v254 = vpop.f32.mrb[0].mxu0
    %v255 = vadd.f32 0.0, %v254
    %v256 = vpop.f32.mrb[0].mxu0
    %257 = vdwg.mxu0
    %v258 = vmul.f32 %v252, 0.35355338
    %v259 = vmul.f32 %v255, 0.35355338
    %v260 = vadd.f32 %v258, %v137
    %v261 = vadd.f32 %v259, %v138
    %vm262 = vcmask 130048
    %v263 = vsel %vm262, %v260, -inf
    %264 = vmax.xlane.f32.xlu0 %v263
    %v265 = vpop.xlane.xlu0 %264
    %v266 = vsel %vm262, %v261, -inf
    %267 = vmax.xlane.f32.xlu0 %v266
    %v268 = vpop.xlane.xlu0 %267
    %v269 = vsub.f32 %v260, %v265
    %v270 = vsub.f32 %v261, %v268
    %v271 = vmul.f32 %v269, 1.442695
    %v272 = vpow.pop %v271
    %v273 = vmul.f32 %v270, 1.442695
    %v274 = vpow.pop %v273
    %v275 = vsel %vm262, %v272, 0.0
    %276 = vadd.xlane.f32.xlu0 %v275
    %v277 = vpop.xlane.xlu0 %276
    %v278 = vsel %vm262, %v274, 0.0
    %279 = vadd.xlane.f32.xlu0 %v278
    %v280 = vpop.xlane.xlu0 %279
    %v281 = vrcp.pop %v277
    %v282 = vmul.f32 %v272, %v281
    %v283 = vrcp.pop %v280
    %v284 = vmul.f32 %v274, %v283
    %v285 = vpack.c.bf16 %v284, %v282
    %286 = vrot.lane.b32.xlu0 %v206, 64
    %v287 = vpop.permute.xlu0 %286
    %v290 = vsel %vm262, %v285, 0
    %292 = vmatprep.subr.bf16.mxu0 0
    %293 = vmatpush1.bf16.msra.mxu0 %v287
    %294 = vmatprep.subr.bf16.mxu0 0
    %295 = vmatpush1.bf16.msra.mxu0 0
    %296 = vmatprep.subr.bf16.mxu0 0
    %297 = vmatpush1.bf16.msra.mxu0 0
    %298 = vmatprep.subr.bf16.mxu0 0
    %299 = vmatpush1.bf16.msra.mxu0 0
    %300 = vmatprep.subr.bf16.mxu0 0
    %301 = vmatpush1.bf16.msra.mxu0 0
    %302 = vmatprep.subr.bf16.mxu0 0
    %303 = vmatpush1.bf16.msra.mxu0 0
    %304 = vmatprep.subr.bf16.mxu0 0
    %305 = vmatpush1.bf16.msra.mxu0 0
    %306 = vmatprep.subr.bf16.mxu0 0
    %307 = vmatpush1.bf16.msra.mxu0 0
    %308 = vmatprep.subr.bf16.mxu0 0
    %309 = vmatpush1.bf16.msra.mxu0 0
    %310 = vmatprep.subr.bf16.mxu0 0
    %311 = vmatpush1.bf16.msra.mxu0 0
    %312 = vmatprep.subr.bf16.mxu0 0
    %313 = vmatpush1.bf16.msra.mxu0 0
    %314 = vmatprep.subr.bf16.mxu0 0
    %315 = vmatpush1.bf16.msra.mxu0 0
    %316 = vmatprep.subr.bf16.mxu0 0
    %317 = vmatpush1.bf16.msra.mxu0 0
    %318 = vmatprep.subr.bf16.mxu0 0
    %319 = vmatpush1.bf16.msra.mxu0 0
    %320 = vmatprep.subr.bf16.mxu0 0
    %321 = vmatpush1.bf16.msra.mxu0 0
    %322 = vmatprep.subr.bf16.mxu0 0
    %323 = vmatpush1.bf16.msra.mxu0 0
    %324 = vmatprep.mubr.bf16.mxu0 0
    %325 = vmatmul.mubr.bf16.gmra.mrb[0].mxu0 %v290
    %v326 = vpop.f32.mrb[0].mxu0
    %v327 = vadd.f32 0.0, %v326
    %v328 = vpop.f32.mrb[0].mxu0
    %v329 = vpop.f32.mrb[0].mxu0
    %v330 = vadd.f32 0.0, %v329
    %v331 = vpop.f32.mrb[0].mxu0
    %332 = vdwg.mxu0
    %333 = vst.msk [vmem:[#allocation2] sm:$0xff] %vm210, %v327
    %334 = vst.msk [vmem:[#allocation2 + $0x8] sm:$0xff] %vm210, %v330
    %335 = vrot.lane.b32.xlu0 %v206, 120
    %v336 = vpop.permute.xlu0 %335
    %337 = vrot.lane.b32.xlu0 %v206, 88
    %v338 = vpop.permute.xlu0 %337
    %v340 = vsel %vm210, %v336, 0
    %v343 = vsel %vm210, %v338, 0
    %345 = vmatprep.subr.bf16.mxu0 0
    %346 = vmatpush1.bf16.xpose.msra.mxu0 %v343
    %347 = vmatprep.subr.bf16.mxu0 0
    %348 = vmatpush1.bf16.xpose.msra.mxu0 0
    %349 = vmatprep.subr.bf16.mxu0 0
    %350 = vmatpush1.bf16.xpose.msra.mxu0 0
    %351 = vmatprep.subr.bf16.mxu0 0
    %352 = vmatpush1.bf16.xpose.msra.mxu0 0
    %353 = vmatprep.subr.bf16.mxu0 0
    %354 = vmatpush1.bf16.xpose.msra.mxu0 0
    %355 = vmatprep.subr.bf16.mxu0 0
    %356 = vmatpush1.bf16.xpose.msra.mxu0 0
    %357 = vmatprep.subr.bf16.mxu0 0
    %358 = vmatpush1.bf16.xpose.msra.mxu0 0
    %359 = vmatprep.subr.bf16.mxu0 0
    %360 = vmatpush1.bf16.xpose.msra.mxu0 0
    %361 = vmatprep.subr.bf16.mxu0 0
    %362 = vmatpush1.bf16.xpose.msra.mxu0 0
    %363 = vmatprep.subr.bf16.mxu0 0
    %364 = vmatpush1.bf16.xpose.msra.mxu0 0
    %365 = vmatprep.subr.bf16.mxu0 0
    %366 = vmatpush1.bf16.xpose.msra.mxu0 0
    %367 = vmatprep.subr.bf16.mxu0 0
    %368 = vmatpush1.bf16.xpose.msra.mxu0 0
    %369 = vmatprep.subr.bf16.mxu0 0
    %370 = vmatpush1.bf16.xpose.msra.mxu0 0
    %371 = vmatprep.subr.bf16.mxu0 0
    %372 = vmatpush1.bf16.xpose.msra.mxu0 0
    %373 = vmatprep.subr.bf16.mxu0 0
    %374 = vmatpush1.bf16.xpose.msra.mxu0 0
    %375 = vmatprep.subr.bf16.mxu0 0
    %376 = vmatpush1.bf16.xpose.msra.mxu0 0
    %377 = vmatprep.mubr.bf16.mxu0 0
    %378 = vmatmul.mubr.bf16.gmra.mrb[0].mxu0 %v340
    %v379 = vpop.f32.mrb[0].mxu0
    %v380 = vadd.f32 0.0, %v379
    %v381 = vpop.f32.mrb[0].mxu0
    %v382 = vpop.f32.mrb[0].mxu0
    %v383 = vadd.f32 0.0, %v382
    %v384 = vpop.f32.mrb[0].mxu0
    %385 = vdwg.mxu0
    %v386 = vmul.f32 %v380, 0.35355338
    %v387 = vmul.f32 %v383, 0.35355338
    %v388 = vadd.f32 %v386, %v137
    %v389 = vadd.f32 %v387, %v138
    %v390 = vsel %vm262, %v388, -inf
    %391 = vmax.xlane.f32.xlu0 %v390
    %v392 = vpop.xlane.xlu0 %391
    %v393 = vsel %vm262, %v389, -inf
    %394 = vmax.xlane.f32.xlu0 %v393
    %v395 = vpop.xlane.xlu0 %394
    %v396 = vsub.f32 %v388, %v392
    %v397 = vsub.f32 %v389, %v395
    %v398 = vmul.f32 %v396, 1.442695
    %v399 = vpow.pop %v398
    %v400 = vmul.f32 %v397, 1.442695
    %v401 = vpow.pop %v400
    %v402 = vsel %vm262, %v399, 0.0
    %403 = vadd.xlane.f32.xlu0 %v402
    %v404 = vpop.xlane.xlu0 %403
    %v405 = vsel %vm262, %v401, 0.0
    %406 = vadd.xlane.f32.xlu0 %v405
    %v407 = vpop.xlane.xlu0 %406
    %v408 = vrcp.pop %v404
    %v409 = vmul.f32 %v399, %v408
    %v410 = vrcp.pop %v407
    %v411 = vmul.f32 %v401, %v410
    %v412 = vpack.c.bf16 %v411, %v409
    %413 = vrot.lane.b32.xlu0 %v206, 56
    %v414 = vpop.permute.xlu0 %413
    %v417 = vsel %vm262, %v412, 0
    %419 = vmatprep.subr.bf16.mxu0 0
    %420 = vmatpush1.bf16.msra.mxu0 %v414
    %421 = vmatprep.subr.bf16.mxu0 0
    %422 = vmatpush1.bf16.msra.mxu0 0
    %423 = vmatprep.subr.bf16.mxu0 0
    %424 = vmatpush1.bf16.msra.mxu0 0
    %425 = vmatprep.subr.bf16.mxu0 0
    %426 = vmatpush1.bf16.msra.mxu0 0
    %427 = vmatprep.subr.bf16.mxu0 0
    %428 = vmatpush1.bf16.msra.mxu0 0
    %429 = vmatprep.subr.bf16.mxu0 0
    %430 = vmatpush1.bf16.msra.mxu0 0
    %431 = vmatprep.subr.bf16.mxu0 0
    %432 = vmatpush1.bf16.msra.mxu0 0
    %433 = vmatprep.subr.bf16.mxu0 0
    %434 = vmatpush1.bf16.msra.mxu0 0
    %435 = vmatprep.subr.bf16.mxu0 0
    %436 = vmatpush1.bf16.msra.mxu0 0
    %437 = vmatprep.subr.bf16.mxu0 0
    %438 = vmatpush1.bf16.msra.mxu0 0
    %439 = vmatprep.subr.bf16.mxu0 0
    %440 = vmatpush1.bf16.msra.mxu0 0
    %441 = vmatprep.subr.bf16.mxu0 0
    %442 = vmatpush1.bf16.msra.mxu0 0
    %443 = vmatprep.subr.bf16.mxu0 0
    %444 = vmatpush1.bf16.msra.mxu0 0
    %445 = vmatprep.subr.bf16.mxu0 0
    %446 = vmatpush1.bf16.msra.mxu0 0
    %447 = vmatprep.subr.bf16.mxu0 0
    %448 = vmatpush1.bf16.msra.mxu0 0
    %449 = vmatprep.subr.bf16.mxu0 0
    %450 = vmatpush1.bf16.msra.mxu0 0
    %451 = vmatprep.mubr.bf16.mxu0 0
    %452 = vmatmul.mubr.bf16.gmra.mrb[0].mxu0 %v417
    %v453 = vpop.f32.mrb[0].mxu0
    %v454 = vadd.f32 0.0, %v453
    %v455 = vpop.f32.mrb[0].mxu0
    %v456 = vpop.f32.mrb[0].mxu0
    %v457 = vadd.f32 0.0, %v456
    %v458 = vpop.f32.mrb[0].mxu0
    %459 = vdwg.mxu0
    %462 = vrot.lane.b32.xlu0 %v454, 8
    %v463 = vpop.permute.xlu0 %462
    %464 = vrot.lane.b32.xlu0 %v457, 8
    %v465 = vpop.permute.xlu0 %464
    %vm468 = vcmask 130112
    %469 = vst.msk [vmem:[#allocation2] sm:$0xff] %vm468, %v463
    %470 = vst.msk [vmem:[#allocation2 + $0x8] sm:$0xff] %vm468, %v465
    %471 = vrot.lane.b32.xlu0 %v206, 112
    %v472 = vpop.permute.xlu0 %471
    %473 = vrot.lane.b32.xlu0 %v206, 80
    %v474 = vpop.permute.xlu0 %473
    %v476 = vsel %vm210, %v472, 0
    %v479 = vsel %vm210, %v474, 0
    %481 = vmatprep.subr.bf16.mxu0 0
    %482 = vmatpush1.bf16.xpose.msra.mxu0 %v479
    %483 = vmatprep.subr.bf16.mxu0 0
    %484 = vmatpush1.bf16.xpose.msra.mxu0 0
    %485 = vmatprep.subr.bf16.mxu0 0
    %486 = vmatpush1.bf16.xpose.msra.mxu0 0
    %487 = vmatprep.subr.bf16.mxu0 0
    %488 = vmatpush1.bf16.xpose.msra.mxu0 0
    %489 = vmatprep.subr.bf16.mxu0 0
    %490 = vmatpush1.bf16.xpose.msra.mxu0 0
    %491 = vmatprep.subr.bf16.mxu0 0
    %492 = vmatpush1.bf16.xpose.msra.mxu0 0
    %493 = vmatprep.subr.bf16.mxu0 0
    %494 = vmatpush1.bf16.xpose.msra.mxu0 0
    %495 = vmatprep.subr.bf16.mxu0 0
    %496 = vmatpush1.bf16.xpose.msra.mxu0 0
    %497 = vmatprep.subr.bf16.mxu0 0
    %498 = vmatpush1.bf16.xpose.msra.mxu0 0
    %499 = vmatprep.subr.bf16.mxu0 0
    %500 = vmatpush1.bf16.xpose.msra.mxu0 0
    %501 = vmatprep.subr.bf16.mxu0 0
    %502 = vmatpush1.bf16.xpose.msra.mxu0 0
    %503 = vmatprep.subr.bf16.mxu0 0
    %504 = vmatpush1.bf16.xpose.msra.mxu0 0
    %505 = vmatprep.subr.bf16.mxu0 0
    %506 = vmatpush1.bf16.xpose.msra.mxu0 0
    %507 = vmatprep.subr.bf16.mxu0 0
    %508 = vmatpush1.bf16.xpose.msra.mxu0 0
    %509 = vmatprep.subr.bf16.mxu0 0
    %510 = vmatpush1.bf16.xpose.msra.mxu0 0
    %511 = vmatprep.subr.bf16.mxu0 0
    %512 = vmatpush1.bf16.xpose.msra.mxu0 0
    %513 = vmatprep.mubr.bf16.mxu0 0
    %514 = vmatmul.mubr.bf16.gmra.mrb[0].mxu0 %v476
    %v515 = vpop.f32.mrb[0].mxu0
    %v516 = vadd.f32 0.0, %v515
    %v517 = vpop.f32.mrb[0].mxu0
    %v518 = vpop.f32.mrb[0].mxu0
    %v519 = vadd.f32 0.0, %v518
    %v520 = vpop.f32.mrb[0].mxu0
    %521 = vdwg.mxu0
    %v522 = vmul.f32 %v516, 0.35355338
    %v523 = vmul.f32 %v519, 0.35355338
    %v524 = vadd.f32 %v522, %v137
    %v525 = vadd.f32 %v523, %v138
    %v526 = vsel %vm262, %v524, -inf
    %527 = vmax.xlane.f32.xlu0 %v526
    %v528 = vpop.xlane.xlu0 %527
    %v529 = vsel %vm262, %v525, -inf
    %530 = vmax.xlane.f32.xlu0 %v529
    %v531 = vpop.xlane.xlu0 %530
    %v532 = vsub.f32 %v524, %v528
    %v533 = vsub.f32 %v525, %v531
    %v534 = vmul.f32 %v532, 1.442695
    %v535 = vpow.pop %v534
    %v536 = vmul.f32 %v533, 1.442695
    %v537 = vpow.pop %v536
    %v538 = vsel %vm262, %v535, 0.0
    %539 = vadd.xlane.f32.xlu0 %v538
    %v540 = vpop.xlane.xlu0 %539
    %v541 = vsel %vm262, %v537, 0.0
    %542 = vadd.xlane.f32.xlu0 %v541
    %v543 = vpop.xlane.xlu0 %542
    %v544 = vrcp.pop %v540
    %v545 = vmul.f32 %v535, %v544
    %v546 = vrcp.pop %v543
    %v547 = vmul.f32 %v537, %v546
    %v548 = vpack.c.bf16 %v547, %v545
    %549 = vrot.lane.b32.xlu0 %v206, 48
    %v550 = vpop.permute.xlu0 %549
    %v553 = vsel %vm262, %v548, 0
    %555 = vmatprep.subr.bf16.mxu0 0
    %556 = vmatpush1.bf16.msra.mxu0 %v550
    %557 = vmatprep.subr.bf16.mxu0 0
    %558 = vmatpush1.bf16.msra.mxu0 0
    %559 = vmatprep.subr.bf16.mxu0 0
    %560 = vmatpush1.bf16.msra.mxu0 0
    %561 = vmatprep.subr.bf16.mxu0 0
    %562 = vmatpush1.bf16.msra.mxu0 0
    %563 = vmatprep.subr.bf16.mxu0 0
    %564 = vmatpush1.bf16.msra.mxu0 0
    %565 = vmatprep.subr.bf16.mxu0 0
    %566 = vmatpush1.bf16.msra.mxu0 0
    %567 = vmatprep.subr.bf16.mxu0 0
    %568 = vmatpush1.bf16.msra.mxu0 0
    %569 = vmatprep.subr.bf16.mxu0 0
    %570 = vmatpush1.bf16.msra.mxu0 0
    %571 = vmatprep.subr.bf16.mxu0 0
    %572 = vmatpush1.bf16.msra.mxu0 0
    %573 = vmatprep.subr.bf16.mxu0 0
    %574 = vmatpush1.bf16.msra.mxu0 0
    %575 = vmatprep.subr.bf16.mxu0 0
    %576 = vmatpush1.bf16.msra.mxu0 0
    %577 = vmatprep.subr.bf16.mxu0 0
    %578 = vmatpush1.bf16.msra.mxu0 0
    %579 = vmatprep.subr.bf16.mxu0 0
    %580 = vmatpush1.bf16.msra.mxu0 0
    %581 = vmatprep.subr.bf16.mxu0 0
    %582 = vmatpush1.bf16.msra.mxu0 0
    %583 = vmatprep.subr.bf16.mxu0 0
    %584 = vmatpush1.bf16.msra.mxu0 0
    %585 = vmatprep.subr.bf16.mxu0 0
    %586 = vmatpush1.bf16.msra.mxu0 0
    %587 = vmatprep.mubr.bf16.mxu0 0
    %588 = vmatmul.mubr.bf16.gmra.mrb[0].mxu0 %v553
    %v589 = vpop.f32.mrb[0].mxu0
    %v590 = vadd.f32 0.0, %v589
    %v591 = vpop.f32.mrb[0].mxu0
    %v592 = vpop.f32.mrb[0].mxu0
    %v593 = vadd.f32 0.0, %v592
    %v594 = vpop.f32.mrb[0].mxu0
    %595 = vdwg.mxu0
    %598 = vrot.lane.b32.xlu0 %v590, 16
    %v599 = vpop.permute.xlu0 %598
    %600 = vrot.lane.b32.xlu0 %v593, 16
    %v601 = vpop.permute.xlu0 %600
    %vm604 = vcmask 195712
    %605 = vst.msk [vmem:[#allocation2] sm:$0xff] %vm604, %v599
    %606 = vst.msk [vmem:[#allocation2 + $0x8] sm:$0xff] %vm604, %v601
    %607 = vrot.lane.b32.xlu0 %v206, 104
    %v608 = vpop.permute.xlu0 %607
    %609 = vrot.lane.b32.xlu0 %v206, 72
    %v610 = vpop.permute.xlu0 %609
    %v612 = vsel %vm210, %v608, 0
    %v615 = vsel %vm210, %v610, 0
    %617 = vmatprep.subr.bf16.mxu0 0
    %618 = vmatpush1.bf16.xpose.msra.mxu0 %v615
    %619 = vmatprep.subr.bf16.mxu0 0
    %620 = vmatpush1.bf16.xpose.msra.mxu0 0
    %621 = vmatprep.subr.bf16.mxu0 0
    %622 = vmatpush1.bf16.xpose.msra.mxu0 0
    %623 = vmatprep.subr.bf16.mxu0 0
    %624 = vmatpush1.bf16.xpose.msra.mxu0 0
    %625 = vmatprep.subr.bf16.mxu0 0
    %626 = vmatpush1.bf16.xpose.msra.mxu0 0
    %627 = vmatprep.subr.bf16.mxu0 0
    %628 = vmatpush1.bf16.xpose.msra.mxu0 0
    %629 = vmatprep.subr.bf16.mxu0 0
    %630 = vmatpush1.bf16.xpose.msra.mxu0 0
    %631 = vmatprep.subr.bf16.mxu0 0
    %632 = vmatpush1.bf16.xpose.msra.mxu0 0
    %633 = vmatprep.subr.bf16.mxu0 0
    %634 = vmatpush1.bf16.xpose.msra.mxu0 0
    %635 = vmatprep.subr.bf16.mxu0 0
    %636 = vmatpush1.bf16.xpose.msra.mxu0 0
    %637 = vmatprep.subr.bf16.mxu0 0
    %638 = vmatpush1.bf16.xpose.msra.mxu0 0
    %639 = vmatprep.subr.bf16.mxu0 0
    %640 = vmatpush1.bf16.xpose.msra.mxu0 0
    %641 = vmatprep.subr.bf16.mxu0 0
    %642 = vmatpush1.bf16.xpose.msra.mxu0 0
    %643 = vmatprep.subr.bf16.mxu0 0
    %644 = vmatpush1.bf16.xpose.msra.mxu0 0
    %645 = vmatprep.subr.bf16.mxu0 0
    %646 = vmatpush1.bf16.xpose.msra.mxu0 0
    %647 = vmatprep.subr.bf16.mxu0 0
    %648 = vmatpush1.bf16.xpose.msra.mxu0 0
    %649 = vmatprep.mubr.bf16.mxu0 0
    %650 = vmatmul.mubr.bf16.gmra.mrb[0].mxu0 %v612
    %v651 = vpop.f32.mrb[0].mxu0
    %v652 = vadd.f32 0.0, %v651
    %v653 = vpop.f32.mrb[0].mxu0
    %v654 = vpop.f32.mrb[0].mxu0
    %v655 = vadd.f32 0.0, %v654
    %v656 = vpop.f32.mrb[0].mxu0
    %657 = vdwg.mxu0
    %v658 = vmul.f32 %v652, 0.35355338
    %v659 = vmul.f32 %v655, 0.35355338
    %v660 = vadd.f32 %v658, %v137
    %v661 = vadd.f32 %v659, %v138
    %v662 = vsel %vm262, %v660, -inf
    %663 = vmax.xlane.f32.xlu0 %v662
    %v664 = vpop.xlane.xlu0 %663
    %v665 = vsel %vm262, %v661, -inf
    %666 = vmax.xlane.f32.xlu0 %v665
    %v667 = vpop.xlane.xlu0 %666
    %v668 = vsub.f32 %v660, %v664
    %v669 = vsub.f32 %v661, %v667
    %v670 = vmul.f32 %v668, 1.442695
    %v671 = vpow.pop %v670
    %v672 = vmul.f32 %v669, 1.442695
    %v673 = vpow.pop %v672
    %v674 = vsel %vm262, %v671, 0.0
    %675 = vadd.xlane.f32.xlu0 %v674
    %v676 = vpop.xlane.xlu0 %675
    %v677 = vsel %vm262, %v673, 0.0
    %678 = vadd.xlane.f32.xlu0 %v677
    %v679 = vpop.xlane.xlu0 %678
    %v680 = vrcp.pop %v676
    %v681 = vmul.f32 %v671, %v680
    %v682 = vrcp.pop %v679
    %v683 = vmul.f32 %v673, %v682
    %v684 = vpack.c.bf16 %v683, %v681
    %685 = vrot.lane.b32.xlu0 %v206, 40
    %v686 = vpop.permute.xlu0 %685
    %v689 = vsel %vm262, %v684, 0
    %691 = vmatprep.subr.bf16.mxu0 0
    %692 = vmatpush1.bf16.msra.mxu0 %v686
    %693 = vmatprep.subr.bf16.mxu0 0
    %694 = vmatpush1.bf16.msra.mxu0 0
    %695 = vmatprep.subr.bf16.mxu0 0
    %696 = vmatpush1.bf16.msra.mxu0 0
    %697 = vmatprep.subr.bf16.mxu0 0
    %698 = vmatpush1.bf16.msra.mxu0 0
    %699 = vmatprep.subr.bf16.mxu0 0
    %700 = vmatpush1.bf16.msra.mxu0 0
    %701 = vmatprep.subr.bf16.mxu0 0
    %702 = vmatpush1.bf16.msra.mxu0 0
    %703 = vmatprep.subr.bf16.mxu0 0
    %704 = vmatpush1.bf16.msra.mxu0 0
    %705 = vmatprep.subr.bf16.mxu0 0
    %706 = vmatpush1.bf16.msra.mxu0 0
    %707 = vmatprep.subr.bf16.mxu0 0
    %708 = vmatpush1.bf16.msra.mxu0 0
    %709 = vmatprep.subr.bf16.mxu0 0
    %710 = vmatpush1.bf16.msra.mxu0 0
    %711 = vmatprep.subr.bf16.mxu0 0
    %712 = vmatpush1.bf16.msra.mxu0 0
    %713 = vmatprep.subr.bf16.mxu0 0
    %714 = vmatpush1.bf16.msra.mxu0 0
    %715 = vmatprep.subr.bf16.mxu0 0
    %716 = vmatpush1.bf16.msra.mxu0 0
    %717 = vmatprep.subr.bf16.mxu0 0
    %718 = vmatpush1.bf16.msra.mxu0 0
    %719 = vmatprep.subr.bf16.mxu0 0
    %720 = vmatpush1.bf16.msra.mxu0 0
    %721 = vmatprep.subr.bf16.mxu0 0
    %722 = vmatpush1.bf16.msra.mxu0 0
    %723 = vmatprep.mubr.bf16.mxu0 0
    %724 = vmatmul.mubr.bf16.gmra.mrb[0].mxu0 %v689
    %v725 = vpop.f32.mrb[0].mxu0
    %v726 = vadd.f32 0.0, %v725
    %v727 = vpop.f32.mrb[0].mxu0
    %v728 = vpop.f32.mrb[0].mxu0
    %v729 = vadd.f32 0.0, %v728
    %v730 = vpop.f32.mrb[0].mxu0
    %731 = vdwg.mxu0
    %734 = vrot.lane.b32.xlu0 %v726, 24
    %v735 = vpop.permute.xlu0 %734
    %736 = vrot.lane.b32.xlu0 %v729, 24
    %v737 = vpop.permute.xlu0 %736
    %vm740 = vcmask 261312
    %741 = vst.msk [vmem:[#allocation2] sm:$0xff] %vm740, %v735
    %742 = vst.msk [vmem:[#allocation2 + $0x8] sm:$0xff] %vm740, %v737
    %v743 = vld [vmem:[#allocation2] sm:$0xff]
    %v744 = vld [vmem:[#allocation2 + $0x8] sm:$0xff]
    %v745 = vpack.c.bf16 %v744, %v743
    %v746 = vld [vmem:[%s6] sm:$0xf]
    %v747 = vld [vmem:[%s6 + $0x4] sm:$0xf]
    %v748 = vld [vmem:[%s6 + $0x8] sm:$0xf]
    %v749 = vld [vmem:[%s6 + $0xc] sm:$0xf]
    %v750 = vlaneseq
    %v751 = vshrl.u32 %v750, 7
    %v752 = vsub.s32 1, %v751
    %v753 = vrot.slane %v139, %v752
    %v758 = vunpack.c.l.b16 %v746
    %v759 = vunpack.c.l.b16 %v747
    %v760 = vunpack.c.l.b16 %v748
    %v761 = vunpack.c.l.b16 %v749
    %v762 = vpack.c.b16 %v759, %v758
    %v763 = vpack.c.b16 %v761, %v760
    %v767 = vsel %vm161, %v745, 0
    %769 = vmatprep.subr.bf16.mxu0 0
    %770 = vmatpush1.bf16.msra.mxu0 %v762
    %771 = vmatprep.subr.bf16.mxu0 0
    %772 = vmatpush1.bf16.msra.mxu0 %v763
    %773 = vmatprep.subr.bf16.mxu0 0
    %774 = vmatpush1.bf16.msra.mxu0 0
    %775 = vmatprep.subr.bf16.mxu0 0
    %776 = vmatpush1.bf16.msra.mxu0 0
    %777 = vmatprep.subr.bf16.mxu0 0
    %778 = vmatpush1.bf16.msra.mxu0 0
    %779 = vmatprep.subr.bf16.mxu0 0
    %780 = vmatpush1.bf16.msra.mxu0 0
    %781 = vmatprep.subr.bf16.mxu0 0
    %782 = vmatpush1.bf16.msra.mxu0 0
    %783 = vmatprep.subr.bf16.mxu0 0
    %784 = vmatpush1.bf16.msra.mxu0 0
    %785 = vmatprep.subr.bf16.mxu0 0
    %786 = vmatpush1.bf16.msra.mxu0 0
    %787 = vmatprep.subr.bf16.mxu0 0
    %788 = vmatpush1.bf16.msra.mxu0 0
    %789 = vmatprep.subr.bf16.mxu0 0
    %790 = vmatpush1.bf16.msra.mxu0 0
    %791 = vmatprep.subr.bf16.mxu0 0
    %792 = vmatpush1.bf16.msra.mxu0 0
    %793 = vmatprep.subr.bf16.mxu0 0
    %794 = vmatpush1.bf16.msra.mxu0 0
    %795 = vmatprep.subr.bf16.mxu0 0
    %796 = vmatpush1.bf16.msra.mxu0 0
    %797 = vmatprep.subr.bf16.mxu0 0
    %798 = vmatpush1.bf16.msra.mxu0 0
    %799 = vmatprep.subr.bf16.mxu0 0
    %800 = vmatpush1.bf16.msra.mxu0 0
    %801 = vmatprep.mubr.bf16.mxu0 0
    %802 = vmatmul.mubr.bf16.gmra.mrb[0].mxu0 %v767
    %v803 = vpop.f32.mrb[0].mxu0
    %v804 = vadd.f32 %v753, %v803
    %v805 = vpop.f32.mrb[0].mxu0
    %v806 = vpop.f32.mrb[0].mxu0
    %v807 = vadd.f32 %v753, %v806
    %v808 = vpop.f32.mrb[0].mxu0
    %809 = vdwg.mxu0
    %v810 = vadd.f32 %v135, %v804
    %v811 = vadd.f32 %v136, %v807
    %v812 = vsel %vm161, %v810, 0.0
    %813 = vadd.xlane.f32.xlu0 %v812
    %v814 = vpop.xlane.xlu0 %813
    %v815 = vsel %vm161, %v811, 0.0
    %816 = vadd.xlane.f32.xlu0 %v815
    %v817 = vpop.xlane.xlu0 %816
    %v818 = vrcp.pop 32.0
    %v819 = vmul.f32 %v814, %v818
    %v820 = vmul.f32 %v817, %v818
    %v821 = vsub.f32 %v810, %v819
    %v822 = vsub.f32 %v811, %v820
    %v823 = vmul.f32 %v821, %v821
    %v824 = vmul.f32 %v822, %v822
    %v825 = vsel %vm161, %v823, 0.0
    %826 = vadd.xlane.f32.xlu0 %v825
    %v827 = vpop.xlane.xlu0 %826
    %v828 = vsel %vm161, %v824, 0.0
    %829 = vadd.xlane.f32.xlu0 %v828
    %v830 = vpop.xlane.xlu0 %829
    %v831 = vmul.f32 %v827, %v818
    %v832 = vmul.f32 %v830, %v818
    %v833 = vadd.f32 %v831, 1e-05
    %v834 = vadd.f32 %v832, 1e-05
    %v835 = vrsqrt.pop %v833
    %v836 = vrsqrt.pop %v834
    %v837 = vmul.f32 %v821, %v835
    %v838 = vmul.f32 %v822, %v836
    %v839 = vlaneseq
    %v840 = vshrl.u32 %v839, 7
    %v841 = vsub.s32 4, %v840
    %v842 = vrot.slane %v139, %v841
    %v843 = vmul.f32 %v837, %v842
    %v844 = vmul.f32 %v838, %v842
    %v845 = vlaneseq
    %v846 = vshrl.u32 %v845, 7
    %v847 = vsub.s32 5, %v846
    %v848 = vrot.slane %v139, %v847
    %v849 = vadd.f32 %v843, %v848
    %v850 = vadd.f32 %v844, %v848
    %v851 = vpack.c.bf16 %v850, %v849
    %v852 = vld [vmem:[%s7] sm:$0xf]
    %v853 = vld [vmem:[%s7 + $0x4] sm:$0xf]
    %v854 = vld [vmem:[%s7 + $0x8] sm:$0xf]
    %v855 = vld [vmem:[%s7 + $0xc] sm:$0xf]
    %v856 = vlaneseq
    %v857 = vshrl.u32 %v856, 7
    %v858 = vsub.s32 2, %v857
    %v859 = vrot.slane %v139, %v858
    %v864 = vunpack.c.l.b16 %v852
    %v865 = vunpack.c.l.b16 %v853
    %v866 = vunpack.c.l.b16 %v854
    %v867 = vunpack.c.l.b16 %v855
    %v868 = vpack.c.b16 %v865, %v864
    %v869 = vpack.c.b16 %v867, %v866
    %v873 = vsel %vm161, %v851, 0
    %875 = vmatprep.subr.bf16.mxu0 0
    %876 = vmatpush1.bf16.msra.mxu0 %v868
    %877 = vmatprep.subr.bf16.mxu0 0
    %878 = vmatpush1.bf16.msra.mxu0 %v869
    %879 = vmatprep.subr.bf16.mxu0 0
    %880 = vmatpush1.bf16.msra.mxu0 0
    %881 = vmatprep.subr.bf16.mxu0 0
    %882 = vmatpush1.bf16.msra.mxu0 0
    %883 = vmatprep.subr.bf16.mxu0 0
    %884 = vmatpush1.bf16.msra.mxu0 0
    %885 = vmatprep.subr.bf16.mxu0 0
    %886 = vmatpush1.bf16.msra.mxu0 0
    %887 = vmatprep.subr.bf16.mxu0 0
    %888 = vmatpush1.bf16.msra.mxu0 0
    %889 = vmatprep.subr.bf16.mxu0 0
    %890 = vmatpush1.bf16.msra.mxu0 0
    %891 = vmatprep.subr.bf16.mxu0 0
    %892 = vmatpush1.bf16.msra.mxu0 0
    %893 = vmatprep.subr.bf16.mxu0 0
    %894 = vmatpush1.bf16.msra.mxu0 0
    %895 = vmatprep.subr.bf16.mxu0 0
    %896 = vmatpush1.bf16.msra.mxu0 0
    %897 = vmatprep.subr.bf16.mxu0 0
    %898 = vmatpush1.bf16.msra.mxu0 0
    %899 = vmatprep.subr.bf16.mxu0 0
    %900 = vmatpush1.bf16.msra.mxu0 0
    %901 = vmatprep.subr.bf16.mxu0 0
    %902 = vmatpush1.bf16.msra.mxu0 0
    %903 = vmatprep.subr.bf16.mxu0 0
    %904 = vmatpush1.bf16.msra.mxu0 0
    %905 = vmatprep.subr.bf16.mxu0 0
    %906 = vmatpush1.bf16.msra.mxu0 0
    %907 = vmatprep.mubr.bf16.mxu0 0
    %908 = vmatmul.mubr.bf16.gmra.mrb[0].mxu0 %v873
    %v909 = vpop.f32.mrb[0].mxu0
    %v910 = vadd.f32 %v859, %v909
    %v911 = vpop.f32.mrb[0].mxu0
    %v912 = vpop.f32.mrb[0].mxu0
    %v913 = vadd.f32 %v859, %v912
    %v914 = vpop.f32.mrb[0].mxu0
    %915 = vdwg.mxu0
    %v916 = vmax.f32 %v910, 0.0
    %v917 = vmax.f32 %v913, 0.0
    %v918 = vpack.c.bf16 %v917, %v916
    %v919 = vld [vmem:[%s8] sm:$0xf]
    %v920 = vld [vmem:[%s8 + $0x4] sm:$0xf]
    %v921 = vld [vmem:[%s8 + $0x8] sm:$0xf]
    %v922 = vld [vmem:[%s8 + $0xc] sm:$0xf]
    %v923 = vld [vmem:[%s8 + $0x10] sm:$0xf]
    %v924 = vld [vmem:[%s8 + $0x14] sm:$0xf]
    %v925 = vld [vmem:[%s8 + $0x18] sm:$0xf]
    %v926 = vld [vmem:[%s8 + $0x1c] sm:$0xf]
    %v927 = vlaneseq
    %v928 = vshrl.u32 %v927, 7
    %v929 = vsub.s32 3, %v928
    %v930 = vrot.slane %v139, %v929
    %v939 = vunpack.c.l.b16 %v919
    %v940 = vunpack.c.l.b16 %v920
    %v941 = vunpack.c.l.b16 %v921
    %v942 = vunpack.c.l.b16 %v922
    %v943 = vunpack.c.l.b16 %v923
    %v944 = vunpack.c.l.b16 %v924
    %v945 = vunpack.c.l.b16 %v925
    %v946 = vunpack.c.l.b16 %v926
    %v947 = vpack.c.b16 %v940, %v939
    %v948 = vpack.c.b16 %v942, %v941
    %v949 = vpack.c.b16 %v944, %v943
    %v950 = vpack.c.b16 %v946, %v945
    %v956 = vsel %vm88, %v918, 0
    %958 = vmatprep.subr.bf16.mxu0 0
    %959 = vmatpush1.bf16.msra.mxu0 %v947
    %960 = vmatprep.subr.bf16.mxu0 0
    %961 = vmatpush1.bf16.msra.mxu0 %v948
    %962 = vmatprep.subr.bf16.mxu0 0
    %963 = vmatpush1.bf16.msra.mxu0 %v949
    %964 = vmatprep.subr.bf16.mxu0 0
    %965 = vmatpush1.bf16.msra.mxu0 %v950
    %966 = vmatprep.subr.bf16.mxu0 0
    %967 = vmatpush1.bf16.msra.mxu0 0
    %968 = vmatprep.subr.bf16.mxu0 0
    %969 = vmatpush1.bf16.msra.mxu0 0
    %970 = vmatprep.subr.bf16.mxu0 0
    %971 = vmatpush1.bf16.msra.mxu0 0
    %972 = vmatprep.subr.bf16.mxu0 0
    %973 = vmatpush1.bf16.msra.mxu0 0
    %974 = vmatprep.subr.bf16.mxu0 0
    %975 = vmatpush1.bf16.msra.mxu0 0
    %976 = vmatprep.subr.bf16.mxu0 0
    %977 = vmatpush1.bf16.msra.mxu0 0
    %978 = vmatprep.subr.bf16.mxu0 0
    %979 = vmatpush1.bf16.msra.mxu0 0
    %980 = vmatprep.subr.bf16.mxu0 0
    %981 = vmatpush1.bf16.msra.mxu0 0
    %982 = vmatprep.subr.bf16.mxu0 0
    %983 = vmatpush1.bf16.msra.mxu0 0
    %984 = vmatprep.subr.bf16.mxu0 0
    %985 = vmatpush1.bf16.msra.mxu0 0
    %986 = vmatprep.subr.bf16.mxu0 0
    %987 = vmatpush1.bf16.msra.mxu0 0
    %988 = vmatprep.subr.bf16.mxu0 0
    %989 = vmatpush1.bf16.msra.mxu0 0
    %990 = vmatprep.mubr.bf16.mxu0 0
    %991 = vmatmul.mubr.bf16.gmra.mrb[0].mxu0 %v956
    %v992 = vpop.f32.mrb[0].mxu0
    %v993 = vadd.f32 %v930, %v992
    %v994 = vpop.f32.mrb[0].mxu0
    %v995 = vpop.f32.mrb[0].mxu0
    %v996 = vadd.f32 %v930, %v995
    %v997 = vpop.f32.mrb[0].mxu0
    %998 = vdwg.mxu0
    %v999 = vadd.f32 %v849, %v993
    %v1000 = vadd.f32 %v850, %v996
    %v1001 = vsel %vm161, %v999, 0.0
    %1002 = vadd.xlane.f32.xlu0 %v1001
    %v1003 = vpop.xlane.xlu0 %1002
    %v1004 = vsel %vm161, %v1000, 0.0
    %1005 = vadd.xlane.f32.xlu0 %v1004
    %v1006 = vpop.xlane.xlu0 %1005
    %v1007 = vmul.f32 %v1003, %v818
    %v1008 = vmul.f32 %v1006, %v818
    %v1009 = vsub.f32 %v999, %v1007
    %v1010 = vsub.f32 %v1000, %v1008
    %v1011 = vmul.f32 %v1009, %v1009
    %v1012 = vmul.f32 %v1010, %v1010
    %v1013 = vsel %vm161, %v1011, 0.0
    %1014 = vadd.xlane.f32.xlu0 %v1013
    %v1015 = vpop.xlane.xlu0 %1014
    %v1016 = vsel %vm161, %v1012, 0.0
    %1017 = vadd.xlane.f32.xlu0 %v1016
    %v1018 = vpop.xlane.xlu0 %1017
    %v1019 = vmul.f32 %v1015, %v818
    %v1020 = vmul.f32 %v1018, %v818
    %v1021 = vadd.f32 %v1019, 1e-05
    %v1022 = vadd.f32 %v1020, 1e-05
    %v1023 = vrsqrt.pop %v1021
    %v1024 = vrsqrt.pop %v1022
    %v1025 = vmul.f32 %v1009, %v1023
    %v1026 = vmul.f32 %v1010, %v1024
    %v1027 = vlaneseq
    %v1028 = vshrl.u32 %v1027, 7
    %v1029 = vsub.s32 6, %v1028
    %v1030 = vrot.slane %v139, %v1029
    %v1031 = vmul.f32 %v1025, %v1030
    %v1032 = vmul.f32 %v1026, %v1030
    %v1033 = vlaneseq
    %v1034 = vshrl.u32 %v1033, 7
    %v1035 = vsub.s32 7, %v1034
    %v1036 = vrot.slane %v139, %v1035
    %v1037 = vadd.f32 %v1031, %v1036
    %v1038 = vadd.f32 %v1032, %v1036
    %s1039 = scalar_lea.vmem %s9, 8
    %v1040 = vld [vmem:[%s1039] sm:$0xff]
    %v1041 = vpack.c.bf16 %v1038, %v1037
    %s1042 = scalar_lea.vmem %s5, 16
    %v1043 = vld [vmem:[%s1042] sm:$0xf]
    %v1044 = vld [vmem:[%s1042 + $0x4] sm:$0xf]
    %v1045 = vld [vmem:[%s1042 + $0x8] sm:$0xf]
    %v1046 = vld [vmem:[%s1042 + $0xc] sm:$0xf]
    %v1047 = vlaneseq
    %v1048 = vshrl.u32 %v1047, 7
    %v1049 = vsub.s32 0, %v1048
    %v1050 = vrot.slane %v1040, %v1049
    %v1055 = vunpack.c.l.b16 %v1043
    %v1056 = vunpack.c.l.b16 %v1044
    %v1057 = vunpack.c.l.b16 %v1045
    %v1058 = vunpack.c.l.b16 %v1046
    %v1059 = vpack.c.b16 %v1056, %v1055
    %v1060 = vpack.c.b16 %v1058, %v1057
    %v1064 = vsel %vm161, %v1041, 0
    %1066 = vmatprep.subr.bf16.mxu0 0
    %1067 = vmatpush1.bf16.msra.mxu0 %v1059
    %1068 = vmatprep.subr.bf16.mxu0 0
    %1069 = vmatpush1.bf16.msra.mxu0 %v1060
    %1070 = vmatprep.subr.bf16.mxu0 0
    %1071 = vmatpush1.bf16.msra.mxu0 0
    %1072 = vmatprep.subr.bf16.mxu0 0
    %1073 = vmatpush1.bf16.msra.mxu0 0
    %1074 = vmatprep.subr.bf16.mxu0 0
    %1075 = vmatpush1.bf16.msra.mxu0 0
    %1076 = vmatprep.subr.bf16.mxu0 0
    %1077 = vmatpush1.bf16.msra.mxu0 0
    %1078 = vmatprep.subr.bf16.mxu0 0
    %1079 = vmatpush1.bf16.msra.mxu0 0
    %1080 = vmatprep.subr.bf16.mxu0 0
    %1081 = vmatpush1.bf16.msra.mxu0 0
    %1082 = vmatprep.subr.bf16.mxu0 0
    %1083 = vmatpush1.bf16.msra.mxu0 0
    %1084 = vmatprep.subr.bf16.mxu0 0
    %1085 = vmatpush1.bf16.msra.mxu0 0
    %1086 = vmatprep.subr.bf16.mxu0 0
    %1087 = vmatpush1.bf16.msra.mxu0 0
    %1088 = vmatprep.subr.bf16.mxu0 0
    %1089 = vmatpush1.bf16.msra.mxu0 0
    %1090 = vmatprep.subr.bf16.mxu0 0
    %1091 = vmatpush1.bf16.msra.mxu0 0
    %1092 = vmatprep.subr.bf16.mxu0 0
    %1093 = vmatpush1.bf16.msra.mxu0 0
    %1094 = vmatprep.subr.bf16.mxu0 0
    %1095 = vmatpush1.bf16.msra.mxu0 0
    %1096 = vmatprep.subr.bf16.mxu0 0
    %1097 = vmatpush1.bf16.msra.mxu0 0
    %1098 = vmatprep.mubr.bf16.mxu0 0
    %1099 = vmatmul.mubr.bf16.gmra.mrb[0].mxu0 %v1064
    %v1100 = vpop.f32.mrb[0].mxu0
    %v1101 = vadd.f32 %v1050, %v1100
    %v1102 = vpop.f32.mrb[0].mxu0
    %v1103 = vpop.f32.mrb[0].mxu0
    %v1104 = vadd.f32 %v1050, %v1103
    %v1105 = vpop.f32.mrb[0].mxu0
    %1106 = vdwg.mxu0
    %v1107 = vpack.c.bf16 %v1104, %v1101
    %1109 = vrot.lane.b32.xlu0 %v1107, 96
    %v1110 = vpop.permute.xlu0 %1109
    %v1112 = vsel %vm210, %v1107, 0
    %v1115 = vsel %vm210, %v1110, 0
    %1117 = vmatprep.subr.bf16.mxu0 0
    %1118 = vmatpush1.bf16.xpose.msra.mxu0 %v1115
    %1119 = vmatprep.subr.bf16.mxu0 0
    %1120 = vmatpush1.bf16.xpose.msra.mxu0 0
    %1121 = vmatprep.subr.bf16.mxu0 0
    %1122 = vmatpush1.bf16.xpose.msra.mxu0 0
    %1123 = vmatprep.subr.bf16.mxu0 0
    %1124 = vmatpush1.bf16.xpose.msra.mxu0 0
    %1125 = vmatprep.subr.bf16.mxu0 0
    %1126 = vmatpush1.bf16.xpose.msra.mxu0 0
    %1127 = vmatprep.subr.bf16.mxu0 0
    %1128 = vmatpush1.bf16.xpose.msra.mxu0 0
    %1129 = vmatprep.subr.bf16.mxu0 0
    %1130 = vmatpush1.bf16.xpose.msra.mxu0 0
    %1131 = vmatprep.subr.bf16.mxu0 0
    %1132 = vmatpush1.bf16.xpose.msra.mxu0 0
    %1133 = vmatprep.subr.bf16.mxu0 0
    %1134 = vmatpush1.bf16.xpose.msra.mxu0 0
    %1135 = vmatprep.subr.bf16.mxu0 0
    %1136 = vmatpush1.bf16.xpose.msra.mxu0 0
    %1137 = vmatprep.subr.bf16.mxu0 0
    %1138 = vmatpush1.bf16.xpose.msra.mxu0 0
    %1139 = vmatprep.subr.bf16.mxu0 0
    %1140 = vmatpush1.bf16.xpose.msra.mxu0 0
    %1141 = vmatprep.subr.bf16.mxu0 0
    %1142 = vmatpush1.bf16.xpose.msra.mxu0 0
    %1143 = vmatprep.subr.bf16.mxu0 0
    %1144 = vmatpush1.bf16.xpose.msra.mxu0 0
    %1145 = vmatprep.subr.bf16.mxu0 0
    %1146 = vmatpush1.bf16.xpose.msra.mxu0 0
    %1147 = vmatprep.subr.bf16.mxu0 0
    %1148 = vmatpush1.bf16.xpose.msra.mxu0 0
    %1149 = vmatprep.mubr.bf16.mxu0 0
    %1150 = vmatmul.mubr.bf16.gmra.mrb[0].mxu0 %v1112
    %v1151 = vpop.f32.mrb[0].mxu0
    %v1152 = vadd.f32 0.0, %v1151
    %v1153 = vpop.f32.mrb[0].mxu0
    %v1154 = vpop.f32.mrb[0].mxu0
    %v1155 = vadd.f32 0.0, %v1154
    %v1156 = vpop.f32.mrb[0].mxu0
    %1157 = vdwg.mxu0
    %v1158 = vmul.f32 %v1152, 0.35355338
    %v1159 = vmul.f32 %v1155, 0.35355338
    %v1160 = vadd.f32 %v1158, %v137
    %v1161 = vadd.f32 %v1159, %v138
    %v1162 = vsel %vm262, %v1160, -inf
    %1163 = vmax.xlane.f32.xlu0 %v1162
    %v1164 = vpop.xlane.xlu0 %1163
    %v1165 = vsel %vm262, %v1161, -inf
    %1166 = vmax.xlane.f32.xlu0 %v1165
    %v1167 = vpop.xlane.xlu0 %1166
    %v1168 = vsub.f32 %v1160, %v1164
    %v1169 = vsub.f32 %v1161, %v1167
    %v1170 = vmul.f32 %v1168, 1.442695
    %v1171 = vpow.pop %v1170
    %v1172 = vmul.f32 %v1169, 1.442695
    %v1173 = vpow.pop %v1172
    %v1174 = vsel %vm262, %v1171, 0.0
    %1175 = vadd.xlane.f32.xlu0 %v1174
    %v1176 = vpop.xlane.xlu0 %1175
    %v1177 = vsel %vm262, %v1173, 0.0
    %1178 = vadd.xlane.f32.xlu0 %v1177
    %v1179 = vpop.xlane.xlu0 %1178
    %v1180 = vrcp.pop %v1176
    %v1181 = vmul.f32 %v1171, %v1180
    %v1182 = vrcp.pop %v1179
    %v1183 = vmul.f32 %v1173, %v1182
    %v1184 = vpack.c.bf16 %v1183, %v1181
    %1185 = vrot.lane.b32.xlu0 %v1107, 64
    %v1186 = vpop.permute.xlu0 %1185
    %v1189 = vsel %vm262, %v1184, 0
    %1191 = vmatprep.subr.bf16.mxu0 0
    %1192 = vmatpush1.bf16.msra.mxu0 %v1186
    %1193 = vmatprep.subr.bf16.mxu0 0
    %1194 = vmatpush1.bf16.msra.mxu0 0
    %1195 = vmatprep.subr.bf16.mxu0 0
    %1196 = vmatpush1.bf16.msra.mxu0 0
    %1197 = vmatprep.subr.bf16.mxu0 0
    %1198 = vmatpush1.bf16.msra.mxu0 0
    %1199 = vmatprep.subr.bf16.mxu0 0
    %1200 = vmatpush1.bf16.msra.mxu0 0
    %1201 = vmatprep.subr.bf16.mxu0 0
    %1202 = vmatpush1.bf16.msra.mxu0 0
    %1203 = vmatprep.subr.bf16.mxu0 0
    %1204 = vmatpush1.bf16.msra.mxu0 0
    %1205 = vmatprep.subr.bf16.mxu0 0
    %1206 = vmatpush1.bf16.msra.mxu0 0
    %1207 = vmatprep.subr.bf16.mxu0 0
    %1208 = vmatpush1.bf16.msra.mxu0 0
    %1209 = vmatprep.subr.bf16.mxu0 0
    %1210 = vmatpush1.bf16.msra.mxu0 0
    %1211 = vmatprep.subr.bf16.mxu0 0
    %1212 = vmatpush1.bf16.msra.mxu0 0
    %1213 = vmatprep.subr.bf16.mxu0 0
    %1214 = vmatpush1.bf16.msra.mxu0 0
    %1215 = vmatprep.subr.bf16.mxu0 0
    %1216 = vmatpush1.bf16.msra.mxu0 0
    %1217 = vmatprep.subr.bf16.mxu0 0
    %1218 = vmatpush1.bf16.msra.mxu0 0
    %1219 = vmatprep.subr.bf16.mxu0 0
    %1220 = vmatpush1.bf16.msra.mxu0 0
    %1221 = vmatprep.subr.bf16.mxu0 0
    %1222 = vmatpush1.bf16.msra.mxu0 0
    %1223 = vmatprep.mubr.bf16.mxu0 0
    %1224 = vmatmul.mubr.bf16.gmra.mrb[0].mxu0 %v1189
    %v1225 = vpop.f32.mrb[0].mxu0
    %v1226 = vadd.f32 0.0, %v1225
    %v1227 = vpop.f32.mrb[0].mxu0
    %v1228 = vpop.f32.mrb[0].mxu0
    %v1229 = vadd.f32 0.0, %v1228
    %v1230 = vpop.f32.mrb[0].mxu0
    %1231 = vdwg.mxu0
    %1232 = vst.msk [vmem:[#allocation2] sm:$0xff] %vm210, %v1226
    %1233 = vst.msk [vmem:[#allocation2 + $0x8] sm:$0xff] %vm210, %v1229
    %1234 = vrot.lane.b32.xlu0 %v1107, 120
    %v1235 = vpop.permute.xlu0 %1234
    %1236 = vrot.lane.b32.xlu0 %v1107, 88
    %v1237 = vpop.permute.xlu0 %1236
    %v1239 = vsel %vm210, %v1235, 0
    %v1242 = vsel %vm210, %v1237, 0
    %1244 = vmatprep.subr.bf16.mxu0 0
    %1245 = vmatpush1.bf16.xpose.msra.mxu0 %v1242
    %1246 = vmatprep.subr.bf16.mxu0 0
    %1247 = vmatpush1.bf16.xpose.msra.mxu0 0
    %1248 = vmatprep.subr.bf16.mxu0 0
    %1249 = vmatpush1.bf16.xpose.msra.mxu0 0
    %1250 = vmatprep.subr.bf16.mxu0 0
    %1251 = vmatpush1.bf16.xpose.msra.mxu0 0
    %1252 = vmatprep.subr.bf16.mxu0 0
    %1253 = vmatpush1.bf16.xpose.msra.mxu0 0
    %1254 = vmatprep.subr.bf16.mxu0 0
    %1255 = vmatpush1.bf16.xpose.msra.mxu0 0
    %1256 = vmatprep.subr.bf16.mxu0 0
    %1257 = vmatpush1.bf16.xpose.msra.mxu0 0
    %1258 = vmatprep.subr.bf16.mxu0 0
    %1259 = vmatpush1.bf16.xpose.msra.mxu0 0
    %1260 = vmatprep.subr.bf16.mxu0 0
    %1261 = vmatpush1.bf16.xpose.msra.mxu0 0
    %1262 = vmatprep.subr.bf16.mxu0 0
    %1263 = vmatpush1.bf16.xpose.msra.mxu0 0
    %1264 = vmatprep.subr.bf16.mxu0 0
    %1265 = vmatpush1.bf16.xpose.msra.mxu0 0
    %1266 = vmatprep.subr.bf16.mxu0 0
    %1267 = vmatpush1.bf16.xpose.msra.mxu0 0
    %1268 = vmatprep.subr.bf16.mxu0 0
    %1269 = vmatpush1.bf16.xpose.msra.mxu0 0
    %1270 = vmatprep.subr.bf16.mxu0 0
    %1271 = vmatpush1.bf16.xpose.msra.mxu0 0
    %1272 = vmatprep.subr.bf16.mxu0 0
    %1273 = vmatpush1.bf16.xpose.msra.mxu0 0
    %1274 = vmatprep.subr.bf16.mxu0 0
    %1275 = vmatpush1.bf16.xpose.msra.mxu0 0
    %1276 = vmatprep.mubr.bf16.mxu0 0
    %1277 = vmatmul.mubr.bf16.gmra.mrb[0].mxu0 %v1239
    %v1278 = vpop.f32.mrb[0].mxu0
    %v1279 = vadd.f32 0.0, %v1278
    %v1280 = vpop.f32.mrb[0].mxu0
    %v1281 = vpop.f32.mrb[0].mxu0
    %v1282 = vadd.f32 0.0, %v1281
    %v1283 = vpop.f32.mrb[0].mxu0
    %1284 = vdwg.mxu0
    %v1285 = vmul.f32 %v1279, 0.35355338
    %v1286 = vmul.f32 %v1282, 0.35355338
    %v1287 = vadd.f32 %v1285, %v137
    %v1288 = vadd.f32 %v1286, %v138
    %v1289 = vsel %vm262, %v1287, -inf
    %1290 = vmax.xlane.f32.xlu0 %v1289
    %v1291 = vpop.xlane.xlu0 %1290
    %v1292 = vsel %vm262, %v1288, -inf
    %1293 = vmax.xlane.f32.xlu0 %v1292
    %v1294 = vpop.xlane.xlu0 %1293
    %v1295 = vsub.f32 %v1287, %v1291
    %v1296 = vsub.f32 %v1288, %v1294
    %v1297 = vmul.f32 %v1295, 1.442695
    %v1298 = vpow.pop %v1297
    %v1299 = vmul.f32 %v1296, 1.442695
    %v1300 = vpow.pop %v1299
    %v1301 = vsel %vm262, %v1298, 0.0
    %1302 = vadd.xlane.f32.xlu0 %v1301
    %v1303 = vpop.xlane.xlu0 %1302
    %v1304 = vsel %vm262, %v1300, 0.0
    %1305 = vadd.xlane.f32.xlu0 %v1304
    %v1306 = vpop.xlane.xlu0 %1305
    %v1307 = vrcp.pop %v1303
    %v1308 = vmul.f32 %v1298, %v1307
    %v1309 = vrcp.pop %v1306
    %v1310 = vmul.f32 %v1300, %v1309
    %v1311 = vpack.c.bf16 %v1310, %v1308
    %1312 = vrot.lane.b32.xlu0 %v1107, 56
    %v1313 = vpop.permute.xlu0 %1312
    %v1316 = vsel %vm262, %v1311, 0
    %1318 = vmatprep.subr.bf16.mxu0 0
    %1319 = vmatpush1.bf16.msra.mxu0 %v1313
    %1320 = vmatprep.subr.bf16.mxu0 0
    %1321 = vmatpush1.bf16.msra.mxu0 0
    %1322 = vmatprep.subr.bf16.mxu0 0
    %1323 = vmatpush1.bf16.msra.mxu0 0
    %1324 = vmatprep.subr.bf16.mxu0 0
    %1325 = vmatpush1.bf16.msra.mxu0 0
    %1326 = vmatprep.subr.bf16.mxu0 0
    %1327 = vmatpush1.bf16.msra.mxu0 0
    %1328 = vmatprep.subr.bf16.mxu0 0
    %1329 = vmatpush1.bf16.msra.mxu0 0
    %1330 = vmatprep.subr.bf16.mxu0 0
    %1331 = vmatpush1.bf16.msra.mxu0 0
    %1332 = vmatprep.subr.bf16.mxu0 0
    %1333 = vmatpush1.bf16.msra.mxu0 0
    %1334 = vmatprep.subr.bf16.mxu0 0
    %1335 = vmatpush1.bf16.msra.mxu0 0
    %1336 = vmatprep.subr.bf16.mxu0 0
    %1337 = vmatpush1.bf16.msra.mxu0 0
    %1338 = vmatprep.subr.bf16.mxu0 0
    %1339 = vmatpush1.bf16.msra.mxu0 0
    %1340 = vmatprep.subr.bf16.mxu0 0
    %1341 = vmatpush1.bf16.msra.mxu0 0
    %1342 = vmatprep.subr.bf16.mxu0 0
    %1343 = vmatpush1.bf16.msra.mxu0 0
    %1344 = vmatprep.subr.bf16.mxu0 0
    %1345 = vmatpush1.bf16.msra.mxu0 0
    %1346 = vmatprep.subr.bf16.mxu0 0
    %1347 = vmatpush1.bf16.msra.mxu0 0
    %1348 = vmatprep.subr.bf16.mxu0 0
    %1349 = vmatpush1.bf16.msra.mxu0 0
    %1350 = vmatprep.mubr.bf16.mxu0 0
    %1351 = vmatmul.mubr.bf16.gmra.mrb[0].mxu0 %v1316
    %v1352 = vpop.f32.mrb[0].mxu0
    %v1353 = vadd.f32 0.0, %v1352
    %v1354 = vpop.f32.mrb[0].mxu0
    %v1355 = vpop.f32.mrb[0].mxu0
    %v1356 = vadd.f32 0.0, %v1355
    %v1357 = vpop.f32.mrb[0].mxu0
    %1358 = vdwg.mxu0
    %1361 = vrot.lane.b32.xlu0 %v1353, 8
    %v1362 = vpop.permute.xlu0 %1361
    %1363 = vrot.lane.b32.xlu0 %v1356, 8
    %v1364 = vpop.permute.xlu0 %1363
    %1367 = vst.msk [vmem:[#allocation2] sm:$0xff] %vm468, %v1362
    %1368 = vst.msk [vmem:[#allocation2 + $0x8] sm:$0xff] %vm468, %v1364
    %1369 = vrot.lane.b32.xlu0 %v1107, 112
    %v1370 = vpop.permute.xlu0 %1369
    %1371 = vrot.lane.b32.xlu0 %v1107, 80
    %v1372 = vpop.permute.xlu0 %1371
    %v1374 = vsel %vm210, %v1370, 0
    %v1377 = vsel %vm210, %v1372, 0
    %1379 = vmatprep.subr.bf16.mxu0 0
    %1380 = vmatpush1.bf16.xpose.msra.mxu0 %v1377
    %1381 = vmatprep.subr.bf16.mxu0 0
    %1382 = vmatpush1.bf16.xpose.msra.mxu0 0
    %1383 = vmatprep.subr.bf16.mxu0 0
    %1384 = vmatpush1.bf16.xpose.msra.mxu0 0
    %1385 = vmatprep.subr.bf16.mxu0 0
    %1386 = vmatpush1.bf16.xpose.msra.mxu0 0
    %1387 = vmatprep.subr.bf16.mxu0 0
    %1388 = vmatpush1.bf16.xpose.msra.mxu0 0
    %1389 = vmatprep.subr.bf16.mxu0 0
    %1390 = vmatpush1.bf16.xpose.msra.mxu0 0
    %1391 = vmatprep.subr.bf16.mxu0 0
    %1392 = vmatpush1.bf16.xpose.msra.mxu0 0
    %1393 = vmatprep.subr.bf16.mxu0 0
    %1394 = vmatpush1.bf16.xpose.msra.mxu0 0
    %1395 = vmatprep.subr.bf16.mxu0 0
    %1396 = vmatpush1.bf16.xpose.msra.mxu0 0
    %1397 = vmatprep.subr.bf16.mxu0 0
    %1398 = vmatpush1.bf16.xpose.msra.mxu0 0
    %1399 = vmatprep.subr.bf16.mxu0 0
    %1400 = vmatpush1.bf16.xpose.msra.mxu0 0
    %1401 = vmatprep.subr.bf16.mxu0 0
    %1402 = vmatpush1.bf16.xpose.msra.mxu0 0
    %1403 = vmatprep.subr.bf16.mxu0 0
    %1404 = vmatpush1.bf16.xpose.msra.mxu0 0
    %1405 = vmatprep.subr.bf16.mxu0 0
    %1406 = vmatpush1.bf16.xpose.msra.mxu0 0
    %1407 = vmatprep.subr.bf16.mxu0 0
    %1408 = vmatpush1.bf16.xpose.msra.mxu0 0
    %1409 = vmatprep.subr.bf16.mxu0 0
    %1410 = vmatpush1.bf16.xpose.msra.mxu0 0
    %1411 = vmatprep.mubr.bf16.mxu0 0
    %1412 = vmatmul.mubr.bf16.gmra.mrb[0].mxu0 %v1374
    %v1413 = vpop.f32.mrb[0].mxu0
    %v1414 = vadd.f32 0.0, %v1413
    %v1415 = vpop.f32.mrb[0].mxu0
    %v1416 = vpop.f32.mrb[0].mxu0
    %v1417 = vadd.f32 0.0, %v1416
    %v1418 = vpop.f32.mrb[0].mxu0
    %1419 = vdwg.mxu0
    %v1420 = vmul.f32 %v1414, 0.35355338
    %v1421 = vmul.f32 %v1417, 0.35355338
    %v1422 = vadd.f32 %v1420, %v137
    %v1423 = vadd.f32 %v1421, %v138
    %v1424 = vsel %vm262, %v1422, -inf
    %1425 = vmax.xlane.f32.xlu0 %v1424
    %v1426 = vpop.xlane.xlu0 %1425
    %v1427 = vsel %vm262, %v1423, -inf
    %1428 = vmax.xlane.f32.xlu0 %v1427
    %v1429 = vpop.xlane.xlu0 %1428
    %v1430 = vsub.f32 %v1422, %v1426
    %v1431 = vsub.f32 %v1423, %v1429
    %v1432 = vmul.f32 %v1430, 1.442695
    %v1433 = vpow.pop %v1432
    %v1434 = vmul.f32 %v1431, 1.442695
    %v1435 = vpow.pop %v1434
    %v1436 = vsel %vm262, %v1433, 0.0
    %1437 = vadd.xlane.f32.xlu0 %v1436
    %v1438 = vpop.xlane.xlu0 %1437
    %v1439 = vsel %vm262, %v1435, 0.0
    %1440 = vadd.xlane.f32.xlu0 %v1439
    %v1441 = vpop.xlane.xlu0 %1440
    %v1442 = vrcp.pop %v1438
    %v1443 = vmul.f32 %v1433, %v1442
    %v1444 = vrcp.pop %v1441
    %v1445 = vmul.f32 %v1435, %v1444
    %v1446 = vpack.c.bf16 %v1445, %v1443
    %1447 = vrot.lane.b32.xlu0 %v1107, 48
    %v1448 = vpop.permute.xlu0 %1447
    %v1451 = vsel %vm262, %v1446, 0
    %1453 = vmatprep.subr.bf16.mxu0 0
    %1454 = vmatpush1.bf16.msra.mxu0 %v1448
    %1455 = vmatprep.subr.bf16.mxu0 0
    %1456 = vmatpush1.bf16.msra.mxu0 0
    %1457 = vmatprep.subr.bf16.mxu0 0
    %1458 = vmatpush1.bf16.msra.mxu0 0
    %1459 = vmatprep.subr.bf16.mxu0 0
    %1460 = vmatpush1.bf16.msra.mxu0 0
    %1461 = vmatprep.subr.bf16.mxu0 0
    %1462 = vmatpush1.bf16.msra.mxu0 0
    %1463 = vmatprep.subr.bf16.mxu0 0
    %1464 = vmatpush1.bf16.msra.mxu0 0
    %1465 = vmatprep.subr.bf16.mxu0 0
    %1466 = vmatpush1.bf16.msra.mxu0 0
    %1467 = vmatprep.subr.bf16.mxu0 0
    %1468 = vmatpush1.bf16.msra.mxu0 0
    %1469 = vmatprep.subr.bf16.mxu0 0
    %1470 = vmatpush1.bf16.msra.mxu0 0
    %1471 = vmatprep.subr.bf16.mxu0 0
    %1472 = vmatpush1.bf16.msra.mxu0 0
    %1473 = vmatprep.subr.bf16.mxu0 0
    %1474 = vmatpush1.bf16.msra.mxu0 0
    %1475 = vmatprep.subr.bf16.mxu0 0
    %1476 = vmatpush1.bf16.msra.mxu0 0
    %1477 = vmatprep.subr.bf16.mxu0 0
    %1478 = vmatpush1.bf16.msra.mxu0 0
    %1479 = vmatprep.subr.bf16.mxu0 0
    %1480 = vmatpush1.bf16.msra.mxu0 0
    %1481 = vmatprep.subr.bf16.mxu0 0
    %1482 = vmatpush1.bf16.msra.mxu0 0
    %1483 = vmatprep.subr.bf16.mxu0 0
    %1484 = vmatpush1.bf16.msra.mxu0 0
    %1485 = vmatprep.mubr.bf16.mxu0 0
    %1486 = vmatmul.mubr.bf16.gmra.mrb[0].mxu0 %v1451
    %v1487 = vpop.f32.mrb[0].mxu0
    %v1488 = vadd.f32 0.0, %v1487
    %v1489 = vpop.f32.mrb[0].mxu0
    %v1490 = vpop.f32.mrb[0].mxu0
    %v1491 = vadd.f32 0.0, %v1490
    %v1492 = vpop.f32.mrb[0].mxu0
    %1493 = vdwg.mxu0
    %1496 = vrot.lane.b32.xlu0 %v1488, 16
    %v1497 = vpop.permute.xlu0 %1496
    %1498 = vrot.lane.b32.xlu0 %v1491, 16
    %v1499 = vpop.permute.xlu0 %1498
    %1502 = vst.msk [vmem:[#allocation2] sm:$0xff] %vm604, %v1497
    %1503 = vst.msk [vmem:[#allocation2 + $0x8] sm:$0xff] %vm604, %v1499
    %1504 = vrot.lane.b32.xlu0 %v1107, 104
    %v1505 = vpop.permute.xlu0 %1504
    %1506 = vrot.lane.b32.xlu0 %v1107, 72
    %v1507 = vpop.permute.xlu0 %1506
    %v1509 = vsel %vm210, %v1505, 0
    %v1512 = vsel %vm210, %v1507, 0
    %1514 = vmatprep.subr.bf16.mxu0 0
    %1515 = vmatpush1.bf16.xpose.msra.mxu0 %v1512
    %1516 = vmatprep.subr.bf16.mxu0 0
    %1517 = vmatpush1.bf16.xpose.msra.mxu0 0
    %1518 = vmatprep.subr.bf16.mxu0 0
    %1519 = vmatpush1.bf16.xpose.msra.mxu0 0
    %1520 = vmatprep.subr.bf16.mxu0 0
    %1521 = vmatpush1.bf16.xpose.msra.mxu0 0
    %1522 = vmatprep.subr.bf16.mxu0 0
    %1523 = vmatpush1.bf16.xpose.msra.mxu0 0
    %1524 = vmatprep.subr.bf16.mxu0 0
    %1525 = vmatpush1.bf16.xpose.msra.mxu0 0
    %1526 = vmatprep.subr.bf16.mxu0 0
    %1527 = vmatpush1.bf16.xpose.msra.mxu0 0
    %1528 = vmatprep.subr.bf16.mxu0 0
    %1529 = vmatpush1.bf16.xpose.msra.mxu0 0
    %1530 = vmatprep.subr.bf16.mxu0 0
    %1531 = vmatpush1.bf16.xpose.msra.mxu0 0
    %1532 = vmatprep.subr.bf16.mxu0 0
    %1533 = vmatpush1.bf16.xpose.msra.mxu0 0
    %1534 = vmatprep.subr.bf16.mxu0 0
    %1535 = vmatpush1.bf16.xpose.msra.mxu0 0
    %1536 = vmatprep.subr.bf16.mxu0 0
    %1537 = vmatpush1.bf16.xpose.msra.mxu0 0
    %1538 = vmatprep.subr.bf16.mxu0 0
    %1539 = vmatpush1.bf16.xpose.msra.mxu0 0
    %1540 = vmatprep.subr.bf16.mxu0 0
    %1541 = vmatpush1.bf16.xpose.msra.mxu0 0
    %1542 = vmatprep.subr.bf16.mxu0 0
    %1543 = vmatpush1.bf16.xpose.msra.mxu0 0
    %1544 = vmatprep.subr.bf16.mxu0 0
    %1545 = vmatpush1.bf16.xpose.msra.mxu0 0
    %1546 = vmatprep.mubr.bf16.mxu0 0
    %1547 = vmatmul.mubr.bf16.gmra.mrb[0].mxu0 %v1509
    %v1548 = vpop.f32.mrb[0].mxu0
    %v1549 = vadd.f32 0.0, %v1548
    %v1550 = vpop.f32.mrb[0].mxu0
    %v1551 = vpop.f32.mrb[0].mxu0
    %v1552 = vadd.f32 0.0, %v1551
    %v1553 = vpop.f32.mrb[0].mxu0
    %1554 = vdwg.mxu0
    %v1555 = vmul.f32 %v1549, 0.35355338
    %v1556 = vmul.f32 %v1552, 0.35355338
    %v1557 = vadd.f32 %v1555, %v137
    %v1558 = vadd.f32 %v1556, %v138
    %v1559 = vsel %vm262, %v1557, -inf
    %1560 = vmax.xlane.f32.xlu0 %v1559
    %v1561 = vpop.xlane.xlu0 %1560
    %v1562 = vsel %vm262, %v1558, -inf
    %1563 = vmax.xlane.f32.xlu0 %v1562
    %v1564 = vpop.xlane.xlu0 %1563
    %v1565 = vsub.f32 %v1557, %v1561
    %v1566 = vsub.f32 %v1558, %v1564
    %v1567 = vmul.f32 %v1565, 1.442695
    %v1568 = vpow.pop %v1567
    %v1569 = vmul.f32 %v1566, 1.442695
    %v1570 = vpow.pop %v1569
    %v1571 = vsel %vm262, %v1568, 0.0
    %1572 = vadd.xlane.f32.xlu0 %v1571
    %v1573 = vpop.xlane.xlu0 %1572
    %v1574 = vsel %vm262, %v1570, 0.0
    %1575 = vadd.xlane.f32.xlu0 %v1574
    %v1576 = vpop.xlane.xlu0 %1575
    %v1577 = vrcp.pop %v1573
    %v1578 = vmul.f32 %v1568, %v1577
    %v1579 = vrcp.pop %v1576
    %v1580 = vmul.f32 %v1570, %v1579
    %v1581 = vpack.c.bf16 %v1580, %v1578
    %1582 = vrot.lane.b32.xlu0 %v1107, 40
    %v1583 = vpop.permute.xlu0 %1582
    %v1586 = vsel %vm262, %v1581, 0
    %1588 = vmatprep.subr.bf16.mxu0 0
    %1589 = vmatpush1.bf16.msra.mxu0 %v1583
    %1590 = vmatprep.subr.bf16.mxu0 0
    %1591 = vmatpush1.bf16.msra.mxu0 0
    %1592 = vmatprep.subr.bf16.mxu0 0
    %1593 = vmatpush1.bf16.msra.mxu0 0
    %1594 = vmatprep.subr.bf16.mxu0 0
    %1595 = vmatpush1.bf16.msra.mxu0 0
    %1596 = vmatprep.subr.bf16.mxu0 0
    %1597 = vmatpush1.bf16.msra.mxu0 0
    %1598 = vmatprep.subr.bf16.mxu0 0
    %1599 = vmatpush1.bf16.msra.mxu0 0
    %1600 = vmatprep.subr.bf16.mxu0 0
    %1601 = vmatpush1.bf16.msra.mxu0 0
    %1602 = vmatprep.subr.bf16.mxu0 0
    %1603 = vmatpush1.bf16.msra.mxu0 0
    %1604 = vmatprep.subr.bf16.mxu0 0
    %1605 = vmatpush1.bf16.msra.mxu0 0
    %1606 = vmatprep.subr.bf16.mxu0 0
    %1607 = vmatpush1.bf16.msra.mxu0 0
    %1608 = vmatprep.subr.bf16.mxu0 0
    %1609 = vmatpush1.bf16.msra.mxu0 0
    %1610 = vmatprep.subr.bf16.mxu0 0
    %1611 = vmatpush1.bf16.msra.mxu0 0
    %1612 = vmatprep.subr.bf16.mxu0 0
    %1613 = vmatpush1.bf16.msra.mxu0 0
    %1614 = vmatprep.subr.bf16.mxu0 0
    %1615 = vmatpush1.bf16.msra.mxu0 0
    %1616 = vmatprep.subr.bf16.mxu0 0
    %1617 = vmatpush1.bf16.msra.mxu0 0
    %1618 = vmatprep.subr.bf16.mxu0 0
    %1619 = vmatpush1.bf16.msra.mxu0 0
    %1620 = vmatprep.mubr.bf16.mxu0 0
    %1621 = vmatmul.mubr.bf16.gmra.mrb[0].mxu0 %v1586
    %v1622 = vpop.f32.mrb[0].mxu0
    %v1623 = vadd.f32 0.0, %v1622
    %v1624 = vpop.f32.mrb[0].mxu0
    %v1625 = vpop.f32.mrb[0].mxu0
    %v1626 = vadd.f32 0.0, %v1625
    %v1627 = vpop.f32.mrb[0].mxu0
    %1628 = vdwg.mxu0
    %1631 = vrot.lane.b32.xlu0 %v1623, 24
    %v1632 = vpop.permute.xlu0 %1631
    %1633 = vrot.lane.b32.xlu0 %v1626, 24
    %v1634 = vpop.permute.xlu0 %1633
    %1637 = vst.msk [vmem:[#allocation2] sm:$0xff] %vm740, %v1632
    %1638 = vst.msk [vmem:[#allocation2 + $0x8] sm:$0xff] %vm740, %v1634
    %v1639 = vld [vmem:[#allocation2] sm:$0xff]
    %v1640 = vld [vmem:[#allocation2 + $0x8] sm:$0xff]
    %v1641 = vpack.c.bf16 %v1640, %v1639
    %s1642 = scalar_lea.vmem %s6, 16
    %v1643 = vld [vmem:[%s1642] sm:$0xf]
    %v1644 = vld [vmem:[%s1642 + $0x4] sm:$0xf]
    %v1645 = vld [vmem:[%s1642 + $0x8] sm:$0xf]
    %v1646 = vld [vmem:[%s1642 + $0xc] sm:$0xf]
    %v1647 = vlaneseq
    %v1648 = vshrl.u32 %v1647, 7
    %v1649 = vsub.s32 1, %v1648
    %v1650 = vrot.slane %v1040, %v1649
    %v1655 = vunpack.c.l.b16 %v1643
    %v1656 = vunpack.c.l.b16 %v1644
    %v1657 = vunpack.c.l.b16 %v1645
    %v1658 = vunpack.c.l.b16 %v1646
    %v1659 = vpack.c.b16 %v1656, %v1655
    %v1660 = vpack.c.b16 %v1658, %v1657
    %v1664 = vsel %vm161, %v1641, 0
    %1666 = vmatprep.subr.bf16.mxu0 0
    %1667 = vmatpush1.bf16.msra.mxu0 %v1659
    %1668 = vmatprep.subr.bf16.mxu0 0
    %1669 = vmatpush1.bf16.msra.mxu0 %v1660
    %1670 = vmatprep.subr.bf16.mxu0 0
    %1671 = vmatpush1.bf16.msra.mxu0 0
    %1672 = vmatprep.subr.bf16.mxu0 0
    %1673 = vmatpush1.bf16.msra.mxu0 0
    %1674 = vmatprep.subr.bf16.mxu0 0
    %1675 = vmatpush1.bf16.msra.mxu0 0
    %1676 = vmatprep.subr.bf16.mxu0 0
    %1677 = vmatpush1.bf16.msra.mxu0 0
    %1678 = vmatprep.subr.bf16.mxu0 0
    %1679 = vmatpush1.bf16.msra.mxu0 0
    %1680 = vmatprep.subr.bf16.mxu0 0
    %1681 = vmatpush1.bf16.msra.mxu0 0
    %1682 = vmatprep.subr.bf16.mxu0 0
    %1683 = vmatpush1.bf16.msra.mxu0 0
    %1684 = vmatprep.subr.bf16.mxu0 0
    %1685 = vmatpush1.bf16.msra.mxu0 0
    %1686 = vmatprep.subr.bf16.mxu0 0
    %1687 = vmatpush1.bf16.msra.mxu0 0
    %1688 = vmatprep.subr.bf16.mxu0 0
    %1689 = vmatpush1.bf16.msra.mxu0 0
    %1690 = vmatprep.subr.bf16.mxu0 0
    %1691 = vmatpush1.bf16.msra.mxu0 0
    %1692 = vmatprep.subr.bf16.mxu0 0
    %1693 = vmatpush1.bf16.msra.mxu0 0
    %1694 = vmatprep.subr.bf16.mxu0 0
    %1695 = vmatpush1.bf16.msra.mxu0 0
    %1696 = vmatprep.subr.bf16.mxu0 0
    %1697 = vmatpush1.bf16.msra.mxu0 0
    %1698 = vmatprep.mubr.bf16.mxu0 0
    %1699 = vmatmul.mubr.bf16.gmra.mrb[0].mxu0 %v1664
    %v1700 = vpop.f32.mrb[0].mxu0
    %v1701 = vadd.f32 %v1650, %v1700
    %v1702 = vpop.f32.mrb[0].mxu0
    %v1703 = vpop.f32.mrb[0].mxu0
    %v1704 = vadd.f32 %v1650, %v1703
    %v1705 = vpop.f32.mrb[0].mxu0
    %1706 = vdwg.mxu0
    %v1707 = vadd.f32 %v1037, %v1701
    %v1708 = vadd.f32 %v1038, %v1704
    %v1709 = vsel %vm161, %v1707, 0.0
    %1710 = vadd.xlane.f32.xlu0 %v1709
    %v1711 = vpop.xlane.xlu0 %1710
    %v1712 = vsel %vm161, %v1708, 0.0
    %1713 = vadd.xlane.f32.xlu0 %v1712
    %v1714 = vpop.xlane.xlu0 %1713
    %v1715 = vmul.f32 %v1711, %v818
    %v1716 = vmul.f32 %v1714, %v818
    %v1717 = vsub.f32 %v1707, %v1715
    %v1718 = vsub.f32 %v1708, %v1716
    %v1719 = vmul.f32 %v1717, %v1717
    %v1720 = vmul.f32 %v1718, %v1718
    %v1721 = vsel %vm161, %v1719, 0.0
    %1722 = vadd.xlane.f32.xlu0 %v1721
    %v1723 = vpop.xlane.xlu0 %1722
    %v1724 = vsel %vm161, %v1720, 0.0
    %1725 = vadd.xlane.f32.xlu0 %v1724
    %v1726 = vpop.xlane.xlu0 %1725
    %v1727 = vmul.f32 %v1723, %v818
    %v1728 = vmul.f32 %v1726, %v818
    %v1729 = vadd.f32 %v1727, 1e-05
    %v1730 = vadd.f32 %v1728, 1e-05
    %v1731 = vrsqrt.pop %v1729
    %v1732 = vrsqrt.pop %v1730
    %v1733 = vmul.f32 %v1717, %v1731
    %v1734 = vmul.f32 %v1718, %v1732
    %v1735 = vlaneseq
    %v1736 = vshrl.u32 %v1735, 7
    %v1737 = vsub.s32 4, %v1736
    %v1738 = vrot.slane %v1040, %v1737
    %v1739 = vmul.f32 %v1733, %v1738
    %v1740 = vmul.f32 %v1734, %v1738
    %v1741 = vlaneseq
    %v1742 = vshrl.u32 %v1741, 7
    %v1743 = vsub.s32 5, %v1742
    %v1744 = vrot.slane %v1040, %v1743
    %v1745 = vadd.f32 %v1739, %v1744
    %v1746 = vadd.f32 %v1740, %v1744
    %v1747 = vpack.c.bf16 %v1746, %v1745
    %s1748 = scalar_lea.vmem %s7, 16
    %v1749 = vld [vmem:[%s1748] sm:$0xf]
    %v1750 = vld [vmem:[%s1748 + $0x4] sm:$0xf]
    %v1751 = vld [vmem:[%s1748 + $0x8] sm:$0xf]
    %v1752 = vld [vmem:[%s1748 + $0xc] sm:$0xf]
    %v1753 = vlaneseq
    %v1754 = vshrl.u32 %v1753, 7
    %v1755 = vsub.s32 2, %v1754
    %v1756 = vrot.slane %v1040, %v1755
    %v1761 = vunpack.c.l.b16 %v1749
    %v1762 = vunpack.c.l.b16 %v1750
    %v1763 = vunpack.c.l.b16 %v1751
    %v1764 = vunpack.c.l.b16 %v1752
    %v1765 = vpack.c.b16 %v1762, %v1761
    %v1766 = vpack.c.b16 %v1764, %v1763
    %v1770 = vsel %vm161, %v1747, 0
    %1772 = vmatprep.subr.bf16.mxu0 0
    %1773 = vmatpush1.bf16.msra.mxu0 %v1765
    %1774 = vmatprep.subr.bf16.mxu0 0
    %1775 = vmatpush1.bf16.msra.mxu0 %v1766
    %1776 = vmatprep.subr.bf16.mxu0 0
    %1777 = vmatpush1.bf16.msra.mxu0 0
    %1778 = vmatprep.subr.bf16.mxu0 0
    %1779 = vmatpush1.bf16.msra.mxu0 0
    %1780 = vmatprep.subr.bf16.mxu0 0
    %1781 = vmatpush1.bf16.msra.mxu0 0
    %1782 = vmatprep.subr.bf16.mxu0 0
    %1783 = vmatpush1.bf16.msra.mxu0 0
    %1784 = vmatprep.subr.bf16.mxu0 0
    %1785 = vmatpush1.bf16.msra.mxu0 0
    %1786 = vmatprep.subr.bf16.mxu0 0
    %1787 = vmatpush1.bf16.msra.mxu0 0
    %1788 = vmatprep.subr.bf16.mxu0 0
    %1789 = vmatpush1.bf16.msra.mxu0 0
    %1790 = vmatprep.subr.bf16.mxu0 0
    %1791 = vmatpush1.bf16.msra.mxu0 0
    %1792 = vmatprep.subr.bf16.mxu0 0
    %1793 = vmatpush1.bf16.msra.mxu0 0
    %1794 = vmatprep.subr.bf16.mxu0 0
    %1795 = vmatpush1.bf16.msra.mxu0 0
    %1796 = vmatprep.subr.bf16.mxu0 0
    %1797 = vmatpush1.bf16.msra.mxu0 0
    %1798 = vmatprep.subr.bf16.mxu0 0
    %1799 = vmatpush1.bf16.msra.mxu0 0
    %1800 = vmatprep.subr.bf16.mxu0 0
    %1801 = vmatpush1.bf16.msra.mxu0 0
    %1802 = vmatprep.subr.bf16.mxu0 0
    %1803 = vmatpush1.bf16.msra.mxu0 0
    %1804 = vmatprep.mubr.bf16.mxu0 0
    %1805 = vmatmul.mubr.bf16.gmra.mrb[0].mxu0 %v1770
    %v1806 = vpop.f32.mrb[0].mxu0
    %v1807 = vadd.f32 %v1756, %v1806
    %v1808 = vpop.f32.mrb[0].mxu0
    %v1809 = vpop.f32.mrb[0].mxu0
    %v1810 = vadd.f32 %v1756, %v1809
    %v1811 = vpop.f32.mrb[0].mxu0
    %1812 = vdwg.mxu0
    %v1813 = vmax.f32 %v1807, 0.0
    %v1814 = vmax.f32 %v1810, 0.0
    %v1815 = vpack.c.bf16 %v1814, %v1813
    %s1816 = scalar_lea.vmem %s8, 32
    %v1817 = vld [vmem:[%s1816] sm:$0xf]
    %v1818 = vld [vmem:[%s1816 + $0x4] sm:$0xf]
    %v1819 = vld [vmem:[%s1816 + $0x8] sm:$0xf]
    %v1820 = vld [vmem:[%s1816 + $0xc] sm:$0xf]
    %v1821 = vld [vmem:[%s1816 + $0x10] sm:$0xf]
    %v1822 = vld [vmem:[%s1816 + $0x14] sm:$0xf]
    %v1823 = vld [vmem:[%s1816 + $0x18] sm:$0xf]
    %v1824 = vld [vmem:[%s1816 + $0x1c] sm:$0xf]
    %v1825 = vlaneseq
    %v1826 = vshrl.u32 %v1825, 7
    %v1827 = vsub.s32 3, %v1826
    %v1828 = vrot.slane %v1040, %v1827
    %v1837 = vunpack.c.l.b16 %v1817
    %v1838 = vunpack.c.l.b16 %v1818
    %v1839 = vunpack.c.l.b16 %v1819
    %v1840 = vunpack.c.l.b16 %v1820
    %v1841 = vunpack.c.l.b16 %v1821
    %v1842 = vunpack.c.l.b16 %v1822
    %v1843 = vunpack.c.l.b16 %v1823
    %v1844 = vunpack.c.l.b16 %v1824
    %v1845 = vpack.c.b16 %v1838, %v1837
    %v1846 = vpack.c.b16 %v1840, %v1839
    %v1847 = vpack.c.b16 %v1842, %v1841
    %v1848 = vpack.c.b16 %v1844, %v1843
    %v1854 = vsel %vm88, %v1815, 0
    %1856 = vmatprep.subr.bf16.mxu0 0
    %1857 = vmatpush1.bf16.msra.mxu0 %v1845
    %1858 = vmatprep.subr.bf16.mxu0 0
    %1859 = vmatpush1.bf16.msra.mxu0 %v1846
    %1860 = vmatprep.subr.bf16.mxu0 0
    %1861 = vmatpush1.bf16.msra.mxu0 %v1847
    %1862 = vmatprep.subr.bf16.mxu0 0
    %1863 = vmatpush1.bf16.msra.mxu0 %v1848
    %1864 = vmatprep.subr.bf16.mxu0 0
    %1865 = vmatpush1.bf16.msra.mxu0 0
    %1866 = vmatprep.subr.bf16.mxu0 0
    %1867 = vmatpush1.bf16.msra.mxu0 0
    %1868 = vmatprep.subr.bf16.mxu0 0
    %1869 = vmatpush1.bf16.msra.mxu0 0
    %1870 = vmatprep.subr.bf16.mxu0 0
    %1871 = vmatpush1.bf16.msra.mxu0 0
    %1872 = vmatprep.subr.bf16.mxu0 0
    %1873 = vmatpush1.bf16.msra.mxu0 0
    %1874 = vmatprep.subr.bf16.mxu0 0
    %1875 = vmatpush1.bf16.msra.mxu0 0
    %1876 = vmatprep.subr.bf16.mxu0 0
    %1877 = vmatpush1.bf16.msra.mxu0 0
    %1878 = vmatprep.subr.bf16.mxu0 0
    %1879 = vmatpush1.bf16.msra.mxu0 0
    %1880 = vmatprep.subr.bf16.mxu0 0
    %1881 = vmatpush1.bf16.msra.mxu0 0
    %1882 = vmatprep.subr.bf16.mxu0 0
    %1883 = vmatpush1.bf16.msra.mxu0 0
    %1884 = vmatprep.subr.bf16.mxu0 0
    %1885 = vmatpush1.bf16.msra.mxu0 0
    %1886 = vmatprep.subr.bf16.mxu0 0
    %1887 = vmatpush1.bf16.msra.mxu0 0
    %1888 = vmatprep.mubr.bf16.mxu0 0
    %1889 = vmatmul.mubr.bf16.gmra.mrb[0].mxu0 %v1854
    %v1890 = vpop.f32.mrb[0].mxu0
    %v1891 = vadd.f32 %v1828, %v1890
    %v1892 = vpop.f32.mrb[0].mxu0
    %v1893 = vpop.f32.mrb[0].mxu0
    %v1894 = vadd.f32 %v1828, %v1893
    %v1895 = vpop.f32.mrb[0].mxu0
    %1896 = vdwg.mxu0
    %v1897 = vadd.f32 %v1745, %v1891
    %v1898 = vadd.f32 %v1746, %v1894
    %v1899 = vsel %vm161, %v1897, 0.0
    %1900 = vadd.xlane.f32.xlu0 %v1899
    %v1901 = vpop.xlane.xlu0 %1900
    %v1902 = vsel %vm161, %v1898, 0.0
    %1903 = vadd.xlane.f32.xlu0 %v1902
    %v1904 = vpop.xlane.xlu0 %1903
    %v1905 = vmul.f32 %v1901, %v818
    %v1906 = vmul.f32 %v1904, %v818
    %v1907 = vsub.f32 %v1897, %v1905
    %v1908 = vsub.f32 %v1898, %v1906
    %v1909 = vmul.f32 %v1907, %v1907
    %v1910 = vmul.f32 %v1908, %v1908
    %v1911 = vsel %vm161, %v1909, 0.0
    %1912 = vadd.xlane.f32.xlu0 %v1911
    %v1913 = vpop.xlane.xlu0 %1912
    %v1914 = vsel %vm161, %v1910, 0.0
    %1915 = vadd.xlane.f32.xlu0 %v1914
    %v1916 = vpop.xlane.xlu0 %1915
    %v1917 = vmul.f32 %v1913, %v818
    %v1918 = vmul.f32 %v1916, %v818
    %v1919 = vadd.f32 %v1917, 1e-05
    %v1920 = vadd.f32 %v1918, 1e-05
    %v1921 = vrsqrt.pop %v1919
    %v1922 = vrsqrt.pop %v1920
    %v1923 = vmul.f32 %v1907, %v1921
    %v1924 = vmul.f32 %v1908, %v1922
    %v1925 = vlaneseq
    %v1926 = vshrl.u32 %v1925, 7
    %v1927 = vsub.s32 6, %v1926
    %v1928 = vrot.slane %v1040, %v1927
    %v1929 = vmul.f32 %v1923, %v1928
    %v1930 = vmul.f32 %v1924, %v1928
    %v1931 = vlaneseq
    %v1932 = vshrl.u32 %v1931, 7
    %v1933 = vsub.s32 7, %v1932
    %v1934 = vrot.slane %v1040, %v1933
    %v1935 = vadd.f32 %v1929, %v1934
    %v1936 = vadd.f32 %v1930, %v1934
    %v1937 = vld [vmem:[%s10] sm:$0x3]
    %v1939 = vsel %vm262, %v1937, 0
    %1941 = vmatprep.subr.mxu0 0.0
    %1942 = vmatpush1.msra.mxu0 %v1935
    %1943 = vmatprep.subr.mxu0 0.0
    %1944 = vmatpush1.msra.mxu0 %v1936
    %1945 = vmatprep.subr.mxu0 0.0
    %1946 = vmatpush1.msra.mxu0 0.0
    %1947 = vmatprep.subr.mxu0 0.0
    %1948 = vmatpush1.msra.mxu0 0.0
    %1949 = vmatprep.subr.mxu0 0.0
    %1950 = vmatpush1.msra.mxu0 0.0
    %1951 = vmatprep.subr.mxu0 0.0
    %1952 = vmatpush1.msra.mxu0 0.0
    %1953 = vmatprep.subr.mxu0 0.0
    %1954 = vmatpush1.msra.mxu0 0.0
    %1955 = vmatprep.subr.mxu0 0.0
    %1956 = vmatpush1.msra.mxu0 0.0
    %1957 = vmatprep.subr.mxu0 0.0
    %1958 = vmatpush1.msra.mxu0 0.0
    %1959 = vmatprep.subr.mxu0 0.0
    %1960 = vmatpush1.msra.mxu0 0.0
    %1961 = vmatprep.subr.mxu0 0.0
    %1962 = vmatpush1.msra.mxu0 0.0
    %1963 = vmatprep.subr.mxu0 0.0
    %1964 = vmatpush1.msra.mxu0 0.0
    %1965 = vmatprep.subr.mxu0 0.0
    %1966 = vmatpush1.msra.mxu0 0.0
    %1967 = vmatprep.subr.mxu0 0.0
    %1968 = vmatpush1.msra.mxu0 0.0
    %1969 = vmatprep.subr.mxu0 0.0
    %1970 = vmatpush1.msra.mxu0 0.0
    %1971 = vmatprep.subr.mxu0 0.0
    %1972 = vmatpush1.msra.mxu0 0.0
    %1973 = vmatprep.subr.mxu0 0.0
    %1974 = vmatpush1.msra.mxu0 0.0
    %1975 = vmatprep.subr.mxu0 0.0
    %1976 = vmatpush1.msra.mxu0 0.0
    %1977 = vmatprep.subr.mxu0 0.0
    %1978 = vmatpush1.msra.mxu0 0.0
    %1979 = vmatprep.subr.mxu0 0.0
    %1980 = vmatpush1.msra.mxu0 0.0
    %1981 = vmatprep.subr.mxu0 0.0
    %1982 = vmatpush1.msra.mxu0 0.0
    %1983 = vmatprep.subr.mxu0 0.0
    %1984 = vmatpush1.msra.mxu0 0.0
    %1985 = vmatprep.subr.mxu0 0.0
    %1986 = vmatpush1.msra.mxu0 0.0
    %1987 = vmatprep.subr.mxu0 0.0
    %1988 = vmatpush1.msra.mxu0 0.0
    %1989 = vmatprep.subr.mxu0 0.0
    %1990 = vmatpush1.msra.mxu0 0.0
    %1991 = vmatprep.subr.mxu0 0.0
    %1992 = vmatpush1.msra.mxu0 0.0
    %1993 = vmatprep.subr.mxu0 0.0
    %1994 = vmatpush1.msra.mxu0 0.0
    %1995 = vmatprep.subr.mxu0 0.0
    %1996 = vmatpush1.msra.mxu0 0.0
    %1997 = vmatprep.subr.mxu0 0.0
    %1998 = vmatpush1.msra.mxu0 0.0
    %1999 = vmatprep.subr.mxu0 0.0
    %2000 = vmatpush1.msra.mxu0 0.0
    %2001 = vmatprep.subr.mxu0 0.0
    %2002 = vmatpush1.msra.mxu0 0.0
    %2003 = vmatprep.subr.mxu0 0.0
    %2004 = vmatpush1.msra.mxu0 0.0
    %2005 = vmatprep.mubr.f32.mxu0 0.0
    %2006 = vmatmul.mubr.f32.gmra.mrb[0].mxu0 %v1939
    %v2007 = vpop.f32.mrb[0].mxu0
    %v2008 = vadd.f32 0.0, %v2007
    %v2009 = vpop.f32.mrb[0].mxu0
    %2010 = vdwg.mxu0
    %v2011 = vpack.c.bf16 %v2008, %v2008
    %v2012 = vld [vmem:[%s11] sm:$0xf]
    %v2013 = vld [vmem:[%s11 + $0x4] sm:$0xf]
    %v2014 = vld [vmem:[%s11 + $0x8] sm:$0xf]
    %v2015 = vld [vmem:[%s11 + $0xc] sm:$0xf]
    %v2016 = vld [vmem:[%s12] sm:$0x1]
    %v2018 = vlaneseq
    %v2019 = vshrl.u32 %v2018, 7
    %v2020 = vsub.s32 0, %v2019
    %v2021 = vrot.slane %v2016, %v2020
    %v2027 = vunpack.c.l.b16 %v2012
    %v2028 = vunpack.c.l.b16 %v2013
    %v2029 = vunpack.c.l.b16 %v2014
    %v2030 = vunpack.c.l.b16 %v2015
    %v2031 = vpack.c.b16 %v2028, %v2027
    %v2032 = vpack.c.b16 %v2030, %v2029
    %v2036 = vsel %vm161, %v2011, 0
    %2038 = vmatprep.subr.bf16.mxu0 0
    %2039 = vmatpush1.bf16.msra.mxu0 %v2031
    %2040 = vmatprep.subr.bf16.mxu0 0
    %2041 = vmatpush1.bf16.msra.mxu0 %v2032
    %2042 = vmatprep.subr.bf16.mxu0 0
    %2043 = vmatpush1.bf16.msra.mxu0 0
    %2044 = vmatprep.subr.bf16.mxu0 0
    %2045 = vmatpush1.bf16.msra.mxu0 0
    %2046 = vmatprep.subr.bf16.mxu0 0
    %2047 = vmatpush1.bf16.msra.mxu0 0
    %2048 = vmatprep.subr.bf16.mxu0 0
    %2049 = vmatpush1.bf16.msra.mxu0 0
    %2050 = vmatprep.subr.bf16.mxu0 0
    %2051 = vmatpush1.bf16.msra.mxu0 0
    %2052 = vmatprep.subr.bf16.mxu0 0
    %2053 = vmatpush1.bf16.msra.mxu0 0
    %2054 = vmatprep.subr.bf16.mxu0 0
    %2055 = vmatpush1.bf16.msra.mxu0 0
    %2056 = vmatprep.subr.bf16.mxu0 0
    %2057 = vmatpush1.bf16.msra.mxu0 0
    %2058 = vmatprep.subr.bf16.mxu0 0
    %2059 = vmatpush1.bf16.msra.mxu0 0
    %2060 = vmatprep.subr.bf16.mxu0 0
    %2061 = vmatpush1.bf16.msra.mxu0 0
    %2062 = vmatprep.subr.bf16.mxu0 0
    %2063 = vmatpush1.bf16.msra.mxu0 0
    %2064 = vmatprep.subr.bf16.mxu0 0
    %2065 = vmatpush1.bf16.msra.mxu0 0
    %2066 = vmatprep.subr.bf16.mxu0 0
    %2067 = vmatpush1.bf16.msra.mxu0 0
    %2068 = vmatprep.subr.bf16.mxu0 0
    %2069 = vmatpush1.bf16.msra.mxu0 0
    %2070 = vmatprep.mubr.bf16.mxu0 0
    %2071 = vmatmul.mubr.bf16.gmra.mrb[0].mxu0 %v2036
    %v2072 = vpop.f32.mrb[0].mxu0
    %v2073 = vadd.f32 %v2021, %v2072
    %v2074 = vpop.f32.mrb[0].mxu0
    %v2075 = vpop.f32.mrb[0].mxu0
    %v2076 = vpop.f32.mrb[0].mxu0
    %2077 = vdwg.mxu0
    %vm2078 = vcmask 254976
    %2079 = vst.msk [vmem:[#allocation3] sm:$0x3] %vm2078, %v2073
    // Predicated region
    $region54: #{transformer_forward.1} parent=1 // pred_check
      _
    $region55: #{transformer_forward.1} parent=1 // pred_check_branch
      %2081 = sbr.rel (0) target = $region57
    $region56: #{transformer_forward.1} parent=1 // pred_region
      %s2083 = ssub.s32 32, 32
      %2084 = vsyncadd [#allocation4], %s2083
      %s2086 = sshll.u32 [#allocation3], 4
      %s2087 = int_to_ptr.vmem [resolvable:$true] %s2086
      %2089 = dma.vmem_to_hbm [thread:$0]  %s2087, 32, %s13, [#allocation4]
    $region57: #{transformer_forward.1} parent=1 // pred_fallthru
      _
    // Predicated region
    $region58: #{transformer_forward.1} parent=1 // pred_check
      _
    $region59: #{transformer_forward.1} parent=1 // pred_check_branch
      %2091 = sbr.rel (0) target = $region61
    $region60: #{transformer_forward.1} parent=1 // pred_region
      %2092 = dma.done [#allocation4], 32
    $region61: #{transformer_forward.1} parent=1 // pred_fallthru
      _
    %2093 = vsyncpa [#allocation4], 1

</llo_original>
